<compile_context>
chip_gen: v7x
topology: tpu7x:2x2x1
jax: 0.10.0
libtpu: 0.0.40
codegen_flags: <defaults>
</compile_context>

<pallas_src>
import functools

import jax
import jax.numpy as jnp
from jax import lax
from jax.experimental import pallas as pl
from jax.experimental.pallas import tpu as pltpu


# ----------------------------- Pallas kernel --------------------------------

def fcn_kernel(x_ref, wenc_ref, w1_ref, w2_ref, wdec_ref, ones_ref, o_ref,
               *, n_block, inv_n_hid, eltwise_dtype, eps=1e-5):
    """One batch tile of the packed FCN forward pass.

    Weight refs hold block-diagonal, pre-transposed ([in, out]) weights in the
    MXU compute dtype; ones_ref is the block-diagonal ones matrix used for
    per-group (per logical batch row) LayerNorm statistics on the MXU.
    """
    mxu_dtype = wenc_ref.dtype
    ones_bd = ones_ref[...]

    def ln_tanh(z):
        # Segmented LayerNorm over each n_hid-wide lane group, then tanh.
        zd = z.astype(mxu_dtype)
        s1 = jnp.dot(zd, ones_bd, preferred_element_type=jnp.float32)
        s2 = jnp.dot(zd * zd, ones_bd, preferred_element_type=jnp.float32)
        mu = s1 * inv_n_hid
        # var = E[z^2] - mu^2: the two reductions are independent (no serial
        # mean -> subtract -> reduce chain); clamp guards fp cancellation.
        var = jnp.maximum(s2 * inv_n_hid - mu * mu, 0.0)
        normed = (z - mu) * lax.rsqrt(var + eps)
        # tanh in bf16 on v6e/v7x (bf16 EUP), f32 on v5e (no bf16 EUP).
        return jnp.tanh(normed.astype(eltwise_dtype))

    x = x_ref[...]

    # encoder -> LayerNorm -> tanh  (matmul in mxu_dtype, f32 accumulation)
    h = jnp.dot(x.astype(mxu_dtype), wenc_ref[...],
                preferred_element_type=jnp.float32)
    h = ln_tanh(h).astype(jnp.float32)           # residual stream stays f32

    def ritz(hh, w1, w2):
        y = jnp.dot(hh.astype(mxu_dtype), w1, preferred_element_type=jnp.float32)
        y = ln_tanh(y)
        y = jnp.dot(y.astype(mxu_dtype), w2, preferred_element_type=jnp.float32)
        y = ln_tanh(y)
        return y.astype(jnp.float32) + hh        # residual add in f32

    if n_block <= 4:
        for b in range(n_block):                 # small: static unroll is fine
            h = ritz(h, w1_ref[b], w2_ref[b])
    else:
        # larger n_block: bound vreg live ranges (avoid spills) while keeping
        # LLO scheduler visibility.
        h = lax.fori_loop(0, n_block,
                          lambda b, hh: ritz(hh, w1_ref[b], w2_ref[b]),
                          h, unroll=True)

    # decoder (packed output is lane-dense and padding-free)
    out = jnp.dot(h.astype(mxu_dtype), wdec_ref[...],
                  preferred_element_type=jnp.float32)
    o_ref[...] = out.astype(o_ref.dtype)


# ------------------------------- wrapper -------------------------------------

def _choose_pack(n_hid, n_in, n_out, max_pack=32, max_hidden_lanes=256):
    """Smallest row-packing factor that makes the hidden stream lane-dense,
    preferring one that also makes the in/out streams lane-dense (bounded so we
    don't inflate MXU work for large n_hid)."""
    hid_ok = [p for p in range(1, max_pack + 1) if (p * n_hid) % 128 == 0]
    if not hid_ok:
        return 1                                  # fallback: unpacked
    best = hid_ok[0]
    for p in hid_ok:
        if p * n_hid > max_hidden_lanes:
            break
        if (p * n_in) % 128 == 0 and (p * n_out) % 128 == 0:
            return p
    return best


def _pick_eltwise_dtype(compute_dtype):
    """bf16 tanh on v6e/v7x (bf16 EUP); f32 on v5e and older (no bf16 EUP)."""
    if jnp.dtype(compute_dtype) == jnp.dtype(jnp.float32):
        return jnp.float32
    try:
        kind = jax.devices()[0].device_kind.lower()
    except Exception:
        kind = ""
    if any(t in kind for t in ("v2", "v3", "v4", "v5")):
        return jnp.float32
    return jnp.bfloat16


def fcn_forward(x, w_enc, w1_stack, w2_stack, w_dec, *,
                batch_tile=512, compute_dtype=jnp.bfloat16):
    """FCN forward pass.  Weights are passed PyTorch-style [out, in]; the
    wrapper transposes / block-diagonalizes / casts them once (layout plumbing,
    not compute)."""
    B, n_in = x.shape
    n_hid = w_enc.shape[0]
    n_block = w1_stack.shape[0]
    n_out = w_dec.shape[0]
    orig_dtype = x.dtype
    eltwise_dtype = _pick_eltwise_dtype(compute_dtype)

    # --- row packing factor & block-diagonal weights (done once) -------------
    P = _choose_pack(n_hid, n_in, n_out)
    L = P * n_hid
    eye = jnp.eye(P, dtype=jnp.float32)
    wenc_bd = jnp.kron(eye, w_enc.T).astype(compute_dtype)          # (P*n_in, L)
    wdec_bd = jnp.kron(eye, w_dec.T).astype(compute_dtype)          # (L, P*n_out)
    w1_bd = jnp.stack([jnp.kron(eye, w1_stack[b].T)
                       for b in range(n_block)]).astype(compute_dtype)   # (nb, L, L)
    w2_bd = jnp.stack([jnp.kron(eye, w2_stack[b].T)
                       for b in range(n_block)]).astype(compute_dtype)   # (nb, L, L)
    ones_bd = jnp.kron(eye, jnp.ones((n_hid, n_hid), jnp.float32)
                       ).astype(compute_dtype)                      # (L, L)

    # --- batch tiling ---------------------------------------------------------
    unit = 8 * P                                   # packing + sublane granularity
    bt = min(int(batch_tile), B)
    bt = max(unit, (bt // unit) * unit)
    B_pad = pl.cdiv(B, bt) * bt
    if B_pad // bt == 1 and B > unit:
        # keep >= 2 grid steps when the batch allows it (both v7x TensorCores)
        bt = max(unit, pl.cdiv(B, 2 * unit) * unit)
        B_pad = pl.cdiv(B, bt) * bt
    grid = (B_pad // bt,)
    rows_tile = bt // P

    if B_pad != B:
        x = jnp.pad(x, ((0, B_pad - B), (0, 0)))   # zero rows stay zero end-to-end
    x_packed = x.reshape(B_pad // P, P * n_in)     # lane-dense, padding-free input

    # --- VMEM budget (explicit limit only when near v5e's 16 MiB default) ----
    wbytes = (wenc_bd.size + w1_bd.size + w2_bd.size + wdec_bd.size
              + ones_bd.size) * jnp.dtype(compute_dtype).itemsize
    vmem_est = (2 * bt * (n_in + n_out) * 4 + 2 * wbytes + 8 * bt * n_hid * 4)
    vmem_limit = None
    if vmem_est > 12 * 1024 * 1024:
        vmem_limit = int(min(max(2 * vmem_est, 32 * 1024 * 1024),
                             64 * 1024 * 1024))

    # --- advisory cost estimate ----------------------------------------------
    rows_total = B_pad // P
    mm_macs = rows_total * ((P * n_in) * L                  # encoder
                            + 2 * n_block * L * L           # Ritz matmuls
                            + L * (P * n_out)               # decoder
                            + (1 + 2 * n_block) * 2 * L * L)  # LN stats matmuls
    flops = 2 * mm_macs
    transcendentals = B_pad * n_hid * (1 + 2 * n_block)     # tanh count
    bytes_accessed = (x_packed.size * x_packed.dtype.itemsize
                      + wbytes + rows_total * P * n_out * 4)

    out = pl.pallas_call(
        functools.partial(fcn_kernel, n_block=n_block, inv_n_hid=1.0 / n_hid,
                          eltwise_dtype=eltwise_dtype),
        out_shape=jax.ShapeDtypeStruct((rows_total, P * n_out), jnp.float32),
        grid_spec=pltpu.PrefetchScalarGridSpec(
            num_scalar_prefetch=0,
            grid=grid,
            in_specs=[
                pl.BlockSpec((rows_tile, P * n_in), lambda i: (i, 0)),
                pl.BlockSpec((P * n_in, L), lambda i: (0, 0)),
                pl.BlockSpec((n_block, L, L), lambda i: (0, 0, 0)),
                pl.BlockSpec((n_block, L, L), lambda i: (0, 0, 0)),
                pl.BlockSpec((L, P * n_out), lambda i: (0, 0)),
                pl.BlockSpec((L, L), lambda i: (0, 0)),
            ],
            out_specs=pl.BlockSpec((rows_tile, P * n_out), lambda i: (i, 0)),
        ),
        compiler_params=pltpu.CompilerParams(
            dimension_semantics=("parallel",),
            vmem_limit_bytes=vmem_limit),
        cost_estimate=pl.CostEstimate(
            flops=int(flops),
            transcendentals=int(transcendentals),
            bytes_accessed=int(bytes_accessed)),
    )(x_packed, wenc_bd, w1_bd, w2_bd, wdec_bd, ones_bd)

    return out.reshape(B_pad, n_out)[:B].astype(orig_dtype)


# ------------------------ deterministic parameter init ----------------------

def xavier_uniform(key, out_features, in_features, gain):
    # matches torch.nn.init.xavier_uniform_ bound for a Linear weight [out, in]
    a = gain * jnp.sqrt(6.0 / (in_features + out_features))
    return jax.random.uniform(key, (out_features, in_features),
                              minval=-a, maxval=a, dtype=jnp.float32)


def make_params(key, N, n_hid, n_block):
    n_in = 2 * N       # bias=False branch of FCN.__init__
    n_out = 2 * N
    keys = jax.random.split(key, 2 + 2 * n_block)
    w_enc = xavier_uniform(keys[0], n_hid, n_in, gain=5.0 / 3.0)
    w_dec = xavier_uniform(keys[1], n_out, n_hid, gain=1.0)
    w1 = jnp.stack([xavier_uniform(keys[2 + 2 * b], n_hid, n_hid, gain=5.0 / 3.0)
                    for b in range(n_block)])
    w2 = jnp.stack([xavier_uniform(keys[3 + 2 * b], n_hid, n_hid, gain=5.0 / 3.0)
                    for b in range(n_block)])
    return w_enc, w1, w2, w_dec


# ------------------------------ pure-JAX reference ---------------------------

def _layer_norm_ref(h, eps=1e-5):
    mu = jnp.mean(h, axis=-1, keepdims=True)
    var = jnp.mean((h - mu) * (h - mu), axis=-1, keepdims=True)
    return (h - mu) * lax.rsqrt(var + eps)


def fcn_reference(x, w_enc, w1_stack, w2_stack, w_dec):
    h = jnp.tanh(_layer_norm_ref(x @ w_enc.T))
    for b in range(w1_stack.shape[0]):
        y = jnp.tanh(_layer_norm_ref(h @ w1_stack[b].T))
        y = jnp.tanh(_layer_norm_ref(y @ w2_stack[b].T))
        h = y + h
    return h @ w_dec.T


# ----------------------------------- main ------------------------------------

if __name__ == "__main__":
    N = 8          # -> input/output feature dim = 2*N = 16
    n_hid = 32
    n_block = 2
    batch = 256    # tiling keeps the grid at >= 2 steps (v7x megacore)

    key = jax.random.PRNGKey(0)
    k_x, k_p = jax.random.split(key)

    x = jax.random.normal(k_x, (batch, 2 * N), dtype=jnp.float32)
    w_enc, w1, w2, w_dec = make_params(k_p, N, n_hid, n_block)

    ref = fcn_reference(x, w_enc, w1, w2, w_dec)

    # f32 MXU path: near-exact (tolerance covers MXU f32 pass decomposition).
    out_f32 = jax.block_until_ready(
        fcn_forward(x, w_enc, w1, w2, w_dec, compute_dtype=jnp.float32))
    assert out_f32.shape == (batch, 2 * N)
    assert jnp.allclose(out_f32, ref, atol=1e-3, rtol=1e-3), "f32 mismatch vs reference"

    # Performance path (bf16 MXU operands, f32 LN stats / residual stream).
    out_bf16 = jax.block_until_ready(
        fcn_forward(x, w_enc, w1, w2, w_dec, compute_dtype=jnp.bfloat16))
    assert out_bf16.shape == (batch, 2 * N)
    assert jnp.allclose(out_bf16, ref, atol=6e-2, rtol=6e-2), "bf16 mismatch vs reference"

    print("KERNEL_OK")
</pallas_src>

<mosaic_0001>
module attributes {stable_mosaic.version = 11 : i64} {
  func.func @fcn_kernel(%arg0: i32, %arg1: memref<16x128xf32, #tpu.memory_space<vmem>>, %arg2: memref<128x256xf32, #tpu.memory_space<vmem>>, %arg3: memref<2x256x256xf32, #tpu.memory_space<vmem>>, %arg4: memref<2x256x256xf32, #tpu.memory_space<vmem>>, %arg5: memref<256x128xf32, #tpu.memory_space<vmem>>, %arg6: memref<256x256xf32, #tpu.memory_space<vmem>>, %arg7: memref<16x128xf32, #tpu.memory_space<vmem>>) attributes {dimension_semantics = [#tpu.dimension_semantics<parallel>], iteration_bounds = array<i64: 2>, scalar_prefetch = 0 : i64, scratch_operands = 0 : i64, tpu.core_type = #tpu.core_type<tc>, window_params = [{transform_indices = @transform_0, window_bounds = array<i64: 16, 128>}, {pipeline_mode = #tpu.pipeline_mode<synchronous>, transform_indices = @transform_1, window_bounds = array<i64: 128, 256>}, {pipeline_mode = #tpu.pipeline_mode<synchronous>, transform_indices = @transform_2, window_bounds = array<i64: 2, 256, 256>}, {pipeline_mode = #tpu.pipeline_mode<synchronous>, transform_indices = @transform_3, window_bounds = array<i64: 2, 256, 256>}, {pipeline_mode = #tpu.pipeline_mode<synchronous>, transform_indices = @transform_4, window_bounds = array<i64: 256, 128>}, {pipeline_mode = #tpu.pipeline_mode<synchronous>, transform_indices = @transform_5, window_bounds = array<i64: 256, 256>}, {transform_indices = @transform_6, window_bounds = array<i64: 16, 128>}]} {
    %c0 = arith.constant 0 : index
    %c0_0 = arith.constant 0 : index
    %0 = vector.load %arg6[%c0, %c0_0] : memref<256x256xf32, #tpu.memory_space<vmem>>, vector<256x256xf32>
    %c0_1 = arith.constant 0 : index
    %c0_2 = arith.constant 0 : index
    %1 = vector.load %arg1[%c0_1, %c0_2] : memref<16x128xf32, #tpu.memory_space<vmem>>, vector<16x128xf32>
    %c0_3 = arith.constant 0 : index
    %c0_4 = arith.constant 0 : index
    %2 = vector.load %arg2[%c0_3, %c0_4] : memref<128x256xf32, #tpu.memory_space<vmem>>, vector<128x256xf32>
    %cst = arith.constant dense<0.000000e+00> : vector<16x256xf32>
    %3 = tpu.matmul %1, %2, %cst {dimension_numbers = #tpu.dot_dimension_numbers<[1], [0], [0], [1], [0, 0, 1, 1], [], []>} : vector<16x128xf32>, vector<128x256xf32>, vector<16x256xf32> -> vector<16x256xf32>
    %cst_5 = arith.constant dense<0.000000e+00> : vector<16x256xf32>
    %4 = tpu.matmul %3, %0, %cst_5 {dimension_numbers = #tpu.dot_dimension_numbers<[1], [0], [0], [1], [0, 0, 1, 1], [], []>} : vector<16x256xf32>, vector<256x256xf32>, vector<16x256xf32> -> vector<16x256xf32>
    %5 = arith.mulf %3, %3 : vector<16x256xf32>
    %cst_6 = arith.constant dense<0.000000e+00> : vector<16x256xf32>
    %6 = tpu.matmul %5, %0, %cst_6 {dimension_numbers = #tpu.dot_dimension_numbers<[1], [0], [0], [1], [0, 0, 1, 1], [], []>} : vector<16x256xf32>, vector<256x256xf32>, vector<16x256xf32> -> vector<16x256xf32>
    %cst_7 = arith.constant 3.125000e-02 : f32
    %7 = vector.broadcast %cst_7 : f32 to vector<16x256xf32>
    %8 = arith.mulf %4, %7 : vector<16x256xf32>
    %cst_8 = arith.constant 3.125000e-02 : f32
    %9 = vector.broadcast %cst_8 : f32 to vector<16x256xf32>
    %10 = arith.mulf %6, %9 : vector<16x256xf32>
    %11 = arith.mulf %8, %8 : vector<16x256xf32>
    %12 = arith.subf %10, %11 : vector<16x256xf32>
    %cst_9 = arith.constant 0.000000e+00 : f32
    %13 = vector.broadcast %cst_9 : f32 to vector<16x256xf32>
    %14 = arith.maximumf %12, %13 : vector<16x256xf32>
    %15 = arith.subf %3, %8 : vector<16x256xf32>
    %cst_10 = arith.constant 9.99999974E-6 : f32
    %16 = vector.broadcast %cst_10 : f32 to vector<16x256xf32>
    %17 = arith.addf %14, %16 : vector<16x256xf32>
    %18 = math.rsqrt %17 : vector<16x256xf32>
    %19 = arith.mulf %15, %18 : vector<16x256xf32>
    %20 = math.tanh %19 : vector<16x256xf32>
    %c0_11 = arith.constant 0 : index
    %c0_12 = arith.constant 0 : index
    %c0_13 = arith.constant 0 : index
    %21 = vector.load %arg3[%c0_11, %c0_12, %c0_13] : memref<2x256x256xf32, #tpu.memory_space<vmem>>, vector<1x256x256xf32>
    %22 = vector.shape_cast %21 : vector<1x256x256xf32> to vector<256x256xf32>
    %c0_14 = arith.constant 0 : index
    %c0_15 = arith.constant 0 : index
    %c0_16 = arith.constant 0 : index
    %23 = vector.load %arg4[%c0_14, %c0_15, %c0_16] : memref<2x256x256xf32, #tpu.memory_space<vmem>>, vector<1x256x256xf32>
    %24 = vector.shape_cast %23 : vector<1x256x256xf32> to vector<256x256xf32>
    %cst_17 = arith.constant dense<0.000000e+00> : vector<16x256xf32>
    %25 = tpu.matmul %20, %22, %cst_17 {dimension_numbers = #tpu.dot_dimension_numbers<[1], [0], [0], [1], [0, 0, 1, 1], [], []>} : vector<16x256xf32>, vector<256x256xf32>, vector<16x256xf32> -> vector<16x256xf32>
    %cst_18 = arith.constant dense<0.000000e+00> : vector<16x256xf32>
    %26 = tpu.matmul %25, %0, %cst_18 {dimension_numbers = #tpu.dot_dimension_numbers<[1], [0], [0], [1], [0, 0, 1, 1], [], []>} : vector<16x256xf32>, vector<256x256xf32>, vector<16x256xf32> -> vector<16x256xf32>
    %27 = arith.mulf %25, %25 : vector<16x256xf32>
    %cst_19 = arith.constant dense<0.000000e+00> : vector<16x256xf32>
    %28 = tpu.matmul %27, %0, %cst_19 {dimension_numbers = #tpu.dot_dimension_numbers<[1], [0], [0], [1], [0, 0, 1, 1], [], []>} : vector<16x256xf32>, vector<256x256xf32>, vector<16x256xf32> -> vector<16x256xf32>
    %cst_20 = arith.constant 3.125000e-02 : f32
    %29 = vector.broadcast %cst_20 : f32 to vector<16x256xf32>
    %30 = arith.mulf %26, %29 : vector<16x256xf32>
    %cst_21 = arith.constant 3.125000e-02 : f32
    %31 = vector.broadcast %cst_21 : f32 to vector<16x256xf32>
    %32 = arith.mulf %28, %31 : vector<16x256xf32>
    %33 = arith.mulf %30, %30 : vector<16x256xf32>
    %34 = arith.subf %32, %33 : vector<16x256xf32>
    %cst_22 = arith.constant 0.000000e+00 : f32
    %35 = vector.broadcast %cst_22 : f32 to vector<16x256xf32>
    %36 = arith.maximumf %34, %35 : vector<16x256xf32>
    %37 = arith.subf %25, %30 : vector<16x256xf32>
    %cst_23 = arith.constant 9.99999974E-6 : f32
    %38 = vector.broadcast %cst_23 : f32 to vector<16x256xf32>
    %39 = arith.addf %36, %38 : vector<16x256xf32>
    %40 = math.rsqrt %39 : vector<16x256xf32>
    %41 = arith.mulf %37, %40 : vector<16x256xf32>
    %42 = math.tanh %41 : vector<16x256xf32>
    %cst_24 = arith.constant dense<0.000000e+00> : vector<16x256xf32>
    %43 = tpu.matmul %42, %24, %cst_24 {dimension_numbers = #tpu.dot_dimension_numbers<[1], [0], [0], [1], [0, 0, 1, 1], [], []>} : vector<16x256xf32>, vector<256x256xf32>, vector<16x256xf32> -> vector<16x256xf32>
    %cst_25 = arith.constant dense<0.000000e+00> : vector<16x256xf32>
    %44 = tpu.matmul %43, %0, %cst_25 {dimension_numbers = #tpu.dot_dimension_numbers<[1], [0], [0], [1], [0, 0, 1, 1], [], []>} : vector<16x256xf32>, vector<256x256xf32>, vector<16x256xf32> -> vector<16x256xf32>
    %45 = arith.mulf %43, %43 : vector<16x256xf32>
    %cst_26 = arith.constant dense<0.000000e+00> : vector<16x256xf32>
    %46 = tpu.matmul %45, %0, %cst_26 {dimension_numbers = #tpu.dot_dimension_numbers<[1], [0], [0], [1], [0, 0, 1, 1], [], []>} : vector<16x256xf32>, vector<256x256xf32>, vector<16x256xf32> -> vector<16x256xf32>
    %cst_27 = arith.constant 3.125000e-02 : f32
    %47 = vector.broadcast %cst_27 : f32 to vector<16x256xf32>
    %48 = arith.mulf %44, %47 : vector<16x256xf32>
    %cst_28 = arith.constant 3.125000e-02 : f32
    %49 = vector.broadcast %cst_28 : f32 to vector<16x256xf32>
    %50 = arith.mulf %46, %49 : vector<16x256xf32>
    %51 = arith.mulf %48, %48 : vector<16x256xf32>
    %52 = arith.subf %50, %51 : vector<16x256xf32>
    %cst_29 = arith.constant 0.000000e+00 : f32
    %53 = vector.broadcast %cst_29 : f32 to vector<16x256xf32>
    %54 = arith.maximumf %52, %53 : vector<16x256xf32>
    %55 = arith.subf %43, %48 : vector<16x256xf32>
    %cst_30 = arith.constant 9.99999974E-6 : f32
    %56 = vector.broadcast %cst_30 : f32 to vector<16x256xf32>
    %57 = arith.addf %54, %56 : vector<16x256xf32>
    %58 = math.rsqrt %57 : vector<16x256xf32>
    %59 = arith.mulf %55, %58 : vector<16x256xf32>
    %60 = math.tanh %59 : vector<16x256xf32>
    %61 = arith.addf %60, %20 : vector<16x256xf32>
    %c1 = arith.constant 1 : index
    %c0_31 = arith.constant 0 : index
    %c0_32 = arith.constant 0 : index
    %62 = vector.load %arg3[%c1, %c0_31, %c0_32] : memref<2x256x256xf32, #tpu.memory_space<vmem>>, vector<1x256x256xf32>
    %63 = vector.shape_cast %62 : vector<1x256x256xf32> to vector<256x256xf32>
    %c1_33 = arith.constant 1 : index
    %c0_34 = arith.constant 0 : index
    %c0_35 = arith.constant 0 : index
    %64 = vector.load %arg4[%c1_33, %c0_34, %c0_35] : memref<2x256x256xf32, #tpu.memory_space<vmem>>, vector<1x256x256xf32>
    %65 = vector.shape_cast %64 : vector<1x256x256xf32> to vector<256x256xf32>
    %cst_36 = arith.constant dense<0.000000e+00> : vector<16x256xf32>
    %66 = tpu.matmul %61, %63, %cst_36 {dimension_numbers = #tpu.dot_dimension_numbers<[1], [0], [0], [1], [0, 0, 1, 1], [], []>} : vector<16x256xf32>, vector<256x256xf32>, vector<16x256xf32> -> vector<16x256xf32>
    %cst_37 = arith.constant dense<0.000000e+00> : vector<16x256xf32>
    %67 = tpu.matmul %66, %0, %cst_37 {dimension_numbers = #tpu.dot_dimension_numbers<[1], [0], [0], [1], [0, 0, 1, 1], [], []>} : vector<16x256xf32>, vector<256x256xf32>, vector<16x256xf32> -> vector<16x256xf32>
    %68 = arith.mulf %66, %66 : vector<16x256xf32>
    %cst_38 = arith.constant dense<0.000000e+00> : vector<16x256xf32>
    %69 = tpu.matmul %68, %0, %cst_38 {dimension_numbers = #tpu.dot_dimension_numbers<[1], [0], [0], [1], [0, 0, 1, 1], [], []>} : vector<16x256xf32>, vector<256x256xf32>, vector<16x256xf32> -> vector<16x256xf32>
    %cst_39 = arith.constant 3.125000e-02 : f32
    %70 = vector.broadcast %cst_39 : f32 to vector<16x256xf32>
    %71 = arith.mulf %67, %70 : vector<16x256xf32>
    %cst_40 = arith.constant 3.125000e-02 : f32
    %72 = vector.broadcast %cst_40 : f32 to vector<16x256xf32>
    %73 = arith.mulf %69, %72 : vector<16x256xf32>
    %74 = arith.mulf %71, %71 : vector<16x256xf32>
    %75 = arith.subf %73, %74 : vector<16x256xf32>
    %cst_41 = arith.constant 0.000000e+00 : f32
    %76 = vector.broadcast %cst_41 : f32 to vector<16x256xf32>
    %77 = arith.maximumf %75, %76 : vector<16x256xf32>
    %78 = arith.subf %66, %71 : vector<16x256xf32>
    %cst_42 = arith.constant 9.99999974E-6 : f32
    %79 = vector.broadcast %cst_42 : f32 to vector<16x256xf32>
    %80 = arith.addf %77, %79 : vector<16x256xf32>
    %81 = math.rsqrt %80 : vector<16x256xf32>
    %82 = arith.mulf %78, %81 : vector<16x256xf32>
    %83 = math.tanh %82 : vector<16x256xf32>
    %cst_43 = arith.constant dense<0.000000e+00> : vector<16x256xf32>
    %84 = tpu.matmul %83, %65, %cst_43 {dimension_numbers = #tpu.dot_dimension_numbers<[1], [0], [0], [1], [0, 0, 1, 1], [], []>} : vector<16x256xf32>, vector<256x256xf32>, vector<16x256xf32> -> vector<16x256xf32>
    %cst_44 = arith.constant dense<0.000000e+00> : vector<16x256xf32>
    %85 = tpu.matmul %84, %0, %cst_44 {dimension_numbers = #tpu.dot_dimension_numbers<[1], [0], [0], [1], [0, 0, 1, 1], [], []>} : vector<16x256xf32>, vector<256x256xf32>, vector<16x256xf32> -> vector<16x256xf32>
    %86 = arith.mulf %84, %84 : vector<16x256xf32>
    %cst_45 = arith.constant dense<0.000000e+00> : vector<16x256xf32>
    %87 = tpu.matmul %86, %0, %cst_45 {dimension_numbers = #tpu.dot_dimension_numbers<[1], [0], [0], [1], [0, 0, 1, 1], [], []>} : vector<16x256xf32>, vector<256x256xf32>, vector<16x256xf32> -> vector<16x256xf32>
    %cst_46 = arith.constant 3.125000e-02 : f32
    %88 = vector.broadcast %cst_46 : f32 to vector<16x256xf32>
    %89 = arith.mulf %85, %88 : vector<16x256xf32>
    %cst_47 = arith.constant 3.125000e-02 : f32
    %90 = vector.broadcast %cst_47 : f32 to vector<16x256xf32>
    %91 = arith.mulf %87, %90 : vector<16x256xf32>
    %92 = arith.mulf %89, %89 : vector<16x256xf32>
    %93 = arith.subf %91, %92 : vector<16x256xf32>
    %cst_48 = arith.constant 0.000000e+00 : f32
    %94 = vector.broadcast %cst_48 : f32 to vector<16x256xf32>
    %95 = arith.maximumf %93, %94 : vector<16x256xf32>
    %96 = arith.subf %84, %89 : vector<16x256xf32>
    %cst_49 = arith.constant 9.99999974E-6 : f32
    %97 = vector.broadcast %cst_49 : f32 to vector<16x256xf32>
    %98 = arith.addf %95, %97 : vector<16x256xf32>
    %99 = math.rsqrt %98 : vector<16x256xf32>
    %100 = arith.mulf %96, %99 : vector<16x256xf32>
    %101 = math.tanh %100 : vector<16x256xf32>
    %102 = arith.addf %101, %61 : vector<16x256xf32>
    %c0_50 = arith.constant 0 : index
    %c0_51 = arith.constant 0 : index
    %103 = vector.load %arg5[%c0_50, %c0_51] : memref<256x128xf32, #tpu.memory_space<vmem>>, vector<256x128xf32>
    %cst_52 = arith.constant dense<0.000000e+00> : vector<16x128xf32>
    %104 = tpu.matmul %102, %103, %cst_52 {dimension_numbers = #tpu.dot_dimension_numbers<[1], [0], [0], [1], [0, 0, 1, 1], [], []>} : vector<16x256xf32>, vector<256x128xf32>, vector<16x128xf32> -> vector<16x128xf32>
    %c0_53 = arith.constant 0 : index
    %c0_54 = arith.constant 0 : index
    %105 = vector.load %arg7[%c0_53, %c0_54] : memref<16x128xf32, #tpu.memory_space<vmem>>, vector<16x128xf32>
    tpu.vector_store %arg7[%c0_53, %c0_54], %104 {strides = array<i32>} : memref<16x128xf32, #tpu.memory_space<vmem>>, vector<16x128xf32>,
    return
  }
  func.func @transform_0(%arg0: i32) -> (i32, i32) {
    %c0_i32 = arith.constant 0 : i32
    %c0_i32_0 = arith.constant 0 : i32
    return %arg0, %c0_i32 : i32, i32
  }
  func.func @transform_1(%arg0: i32) -> (i32, i32) {
    %c0_i32 = arith.constant 0 : i32
    %c0_i32_0 = arith.constant 0 : i32
    %c0_i32_1 = arith.constant 0 : i32
    return %c0_i32, %c0_i32_0 : i32, i32
  }
  func.func @transform_2(%arg0: i32) -> (i32, i32, i32) {
    %c0_i32 = arith.constant 0 : i32
    %c0_i32_0 = arith.constant 0 : i32
    %c0_i32_1 = arith.constant 0 : i32
    %c0_i32_2 = arith.constant 0 : i32
    return %c0_i32, %c0_i32_0, %c0_i32_1 : i32, i32, i32
  }
  func.func @transform_3(%arg0: i32) -> (i32, i32, i32) {
    %c0_i32 = arith.constant 0 : i32
    %c0_i32_0 = arith.constant 0 : i32
    %c0_i32_1 = arith.constant 0 : i32
    %c0_i32_2 = arith.constant 0 : i32
    return %c0_i32, %c0_i32_0, %c0_i32_1 : i32, i32, i32
  }
  func.func @transform_4(%arg0: i32) -> (i32, i32) {
    %c0_i32 = arith.constant 0 : i32
    %c0_i32_0 = arith.constant 0 : i32
    %c0_i32_1 = arith.constant 0 : i32
    return %c0_i32, %c0_i32_0 : i32, i32
  }
  func.func @transform_5(%arg0: i32) -> (i32, i32) {
    %c0_i32 = arith.constant 0 : i32
    %c0_i32_0 = arith.constant 0 : i32
    %c0_i32_1 = arith.constant 0 : i32
    return %c0_i32, %c0_i32_0 : i32, i32
  }
  func.func @transform_6(%arg0: i32) -> (i32, i32) {
    %c0_i32 = arith.constant 0 : i32
    %c0_i32_0 = arith.constant 0 : i32
    return %arg0, %c0_i32 : i32, i32
  }
}

</mosaic_0001>

<llo_original>
// kernel: tpu_custom_call.1
$region0: #{tpu_custom_call.1}
  #allocation0 [shape = 'u32[]', space=smem, size = 0x4, offset = 0x4, fixed_abs, tag = 'smem constant byte address 0x4 - core index']
  #allocation1 [shape = 'u32[144,128]{1,0:T(1,128)}', space=vmem, size = 0x12000, scoped, tag = 'internal scratch']
  %s0 = inlined_call_operand.hbm [shape: f32[32,128], index: 0, kind: input, shape index: {}]
  %s1 = inlined_call_operand.hbm [shape: f32[128,256], index: 1, kind: input, shape index: {}]
  %s2 = inlined_call_operand.hbm [shape: f32[2,256,256], index: 2, kind: input, shape index: {}]
  %s3 = inlined_call_operand.hbm [shape: f32[2,256,256], index: 3, kind: input, shape index: {}]
  %s4 = inlined_call_operand.hbm [shape: f32[256,128], index: 4, kind: input, shape index: {}]
  %s5 = inlined_call_operand.hbm [shape: f32[256,256], index: 5, kind: input, shape index: {}]
  %s6 = inlined_call_operand.hbm [shape: f32[32,128], index: 6, kind: output, shape index: {}]
  %s7 = sld [smem:[#allocation0]]
  $region81: #{tpu_custom_call.1} parent=0
    _
  %s9 = ssub.s32 1, %s7
  %s10 = scalar_select 0, %s9, %s7
  $region1: #{tpu_custom_call.1} parent=0
    #allocation2 [shape = 'u8[16384]{0}', space=vmem, size = 0x4000, scoped, tag = 'input window, operand 0']
    #allocation3 [shape = 's32[2]{0}', space=sflag, size = 0x8, scoped, tag = 'scoped memory for tpu_custom_call.1']
    #allocation4 [shape = 's32[2]{0}', space=sflag, size = 0x8, scoped, tag = 'scoped memory for tpu_custom_call.1']
    #allocation5 [shape = 'u8[131072]{0}', space=vmem, size = 0x20000, scoped, tag = 'input window, operand 1, single buffered']
    #allocation6 [shape = 's32[1]{0}', space=sflag, size = 0x4, scoped, tag = 'scoped memory for tpu_custom_call.1']
    #allocation7 [shape = 'u8[524288]{0}', space=vmem, size = 0x80000, scoped, tag = 'input window, operand 2, single buffered']
    #allocation8 [shape = 'u8[524288]{0}', space=vmem, size = 0x80000, scoped, tag = 'input window, operand 3, single buffered']
    #allocation9 [shape = 's32[1]{0}', space=sflag, size = 0x4, scoped, tag = 'scoped memory for tpu_custom_call.1']
    #allocation10 [shape = 'u8[131072]{0}', space=vmem, size = 0x20000, scoped, tag = 'input window, operand 4, single buffered']
    #allocation11 [shape = 'u8[262144]{0}', space=vmem, size = 0x40000, scoped, tag = 'input window, operand 5, single buffered']
    #allocation12 [shape = 's32[1]{0}', space=sflag, size = 0x4, scoped, tag = 'scoped memory for tpu_custom_call.1']
    #allocation13 [shape = 'u8[16384]{0}', space=vmem, size = 0x4000, scoped, tag = 'output window, operand 0']
    %11 = vsyncpa [#allocation3], 0
    %s12 = scalar_lea.sflag [#allocation3], 1
    %13 = vsyncpa %s12, 0
    %14 = vsyncpa [#allocation6], 0
    %15 = vsyncpa [#allocation9], 0
    %16 = vsyncpa [#allocation12], 0
    %17 = vsyncpa [#allocation4], 0
    %s18 = scalar_lea.sflag [#allocation4], 1
    %19 = vsyncpa %s18, 0
    loop: start=0, step=1, limit=4
    $region2: #{tpu_custom_call.1} parent=1 // loop_pre_header
      _
    $region3: #{tpu_custom_call.1} parent=1 // loop_header
      %s21 = sphi 0, %s25
      %p22 = scmp.ge.s32.totalorder %s21, 4
      %s31 = sphi 0, %s33
      %s34 = sphi 0, %s31
      %s35 = sphi 0, %s34
      %s51 = sphi 0, %s35
      %s55 = sphi 0, %s55
      %s57 = sphi 0, %s55
      %s58 = sphi 0, %s57
      %s72 = sphi 0, %s58
      %s76 = sphi 0, %s76
      %s78 = sphi 0, %s76
      %s79 = sphi 0, %s78
      %s93 = sphi 0, %s79
      %s97 = sphi 0, %s97
      %s99 = sphi 0, %s97
      %s100 = sphi 0, %s99
      %s114 = sphi 0, %s100
      %s118 = sphi 0, %s118
      %s120 = sphi 0, %s118
      %s121 = sphi 0, %s120
      %s135 = sphi 0, %s121
      %s139 = sphi 0, %s139
      %s141 = sphi 0, %s139
      %s142 = sphi 0, %s141
      %s156 = sphi 0, %s142
      %s162 = sphi 0, %s164
      %s165 = sphi 0, %s162
      %s166 = sphi 0, %s165
      %s182 = sphi 0, %s166
    $region4: #{tpu_custom_call.1} parent=1 // loop_header_branch
      %24 = sbr.rel (%p22) target = $region8
    $region5: #{tpu_custom_call.1} parent=1 // loop_body
      %s26 = ssub.s32 %s21, 1
      %s27 = ssub.s32 %s21, 2
      %s28 = sadd.s32 %s21, 1
      %s29 = ssub.s32 %s21, %s28
      %p30 = scmp.eq.s32.totalorder %s29, 0
      %s32 = sadd.s32 %s31, 1
      %s33 = scalar_select %p30, %s31, %s32
      %p36 = pneg %p30
      %p37 = scmp.eq.s32.totalorder %s21, 1
      %p38 = por %p36, %p37
      %p39 = scmp.ne.s32.totalorder %s31, %s34
      %p40 = scmp.eq.s32.totalorder %s21, 0
      %p41 = por %p39, %p40
      %p42 = scmp.ne.s32.totalorder %s31, %s34
      %p43 = scmp.eq.s32.totalorder %s26, 1
      %p44 = por %p42, %p43
      %p45 = scmp.ne.s32.totalorder %s34, %s35
      %p46 = scmp.eq.s32.totalorder %s26, 0
      %p47 = por %p45, %p46
      %p48 = scmp.ne.s32.totalorder %s34, %s35
      %p49 = scmp.eq.s32.totalorder %s27, 1
      %p50 = por %p48, %p49
      %p52 = scmp.ne.s32.totalorder %s35, %s51
      %p53 = scmp.eq.s32.totalorder %s27, 0
      %p54 = por %p52, %p53
      %s56 = sadd.s32 %s55, 1
      %p59 = scmp.eq.s32.totalorder %s21, 1
      %p60 = scmp.ne.s32.totalorder %s55, %s57
      %p61 = scmp.eq.s32.totalorder %s21, 0
      %p62 = por %p60, %p61
      %p63 = scmp.ne.s32.totalorder %s55, %s57
      %p64 = scmp.eq.s32.totalorder %s26, 1
      %p65 = por %p63, %p64
      %p66 = scmp.ne.s32.totalorder %s57, %s58
      %p67 = scmp.eq.s32.totalorder %s26, 0
      %p68 = por %p66, %p67
      %p69 = scmp.ne.s32.totalorder %s57, %s58
      %p70 = scmp.eq.s32.totalorder %s27, 1
      %p71 = por %p69, %p70
      %p73 = scmp.ne.s32.totalorder %s58, %s72
      %p74 = scmp.eq.s32.totalorder %s27, 0
      %p75 = por %p73, %p74
      %s77 = sadd.s32 %s76, 1
      %p80 = scmp.eq.s32.totalorder %s21, 1
      %p81 = scmp.ne.s32.totalorder %s76, %s78
      %p82 = scmp.eq.s32.totalorder %s21, 0
      %p83 = por %p81, %p82
      %p84 = scmp.ne.s32.totalorder %s76, %s78
      %p85 = scmp.eq.s32.totalorder %s26, 1
      %p86 = por %p84, %p85
      %p87 = scmp.ne.s32.totalorder %s78, %s79
      %p88 = scmp.eq.s32.totalorder %s26, 0
      %p89 = por %p87, %p88
      %p90 = scmp.ne.s32.totalorder %s78, %s79
      %p91 = scmp.eq.s32.totalorder %s27, 1
      %p92 = por %p90, %p91
      %p94 = scmp.ne.s32.totalorder %s79, %s93
      %p95 = scmp.eq.s32.totalorder %s27, 0
      %p96 = por %p94, %p95
      %s98 = sadd.s32 %s97, 1
      %p101 = scmp.eq.s32.totalorder %s21, 1
      %p102 = scmp.ne.s32.totalorder %s97, %s99
      %p103 = scmp.eq.s32.totalorder %s21, 0
      %p104 = por %p102, %p103
      %p105 = scmp.ne.s32.totalorder %s97, %s99
      %p106 = scmp.eq.s32.totalorder %s26, 1
      %p107 = por %p105, %p106
      %p108 = scmp.ne.s32.totalorder %s99, %s100
      %p109 = scmp.eq.s32.totalorder %s26, 0
      %p110 = por %p108, %p109
      %p111 = scmp.ne.s32.totalorder %s99, %s100
      %p112 = scmp.eq.s32.totalorder %s27, 1
      %p113 = por %p111, %p112
      %p115 = scmp.ne.s32.totalorder %s100, %s114
      %p116 = scmp.eq.s32.totalorder %s27, 0
      %p117 = por %p115, %p116
      %s119 = sadd.s32 %s118, 1
      %p122 = scmp.eq.s32.totalorder %s21, 1
      %p123 = scmp.ne.s32.totalorder %s118, %s120
      %p124 = scmp.eq.s32.totalorder %s21, 0
      %p125 = por %p123, %p124
      %p126 = scmp.ne.s32.totalorder %s118, %s120
      %p127 = scmp.eq.s32.totalorder %s26, 1
      %p128 = por %p126, %p127
      %p129 = scmp.ne.s32.totalorder %s120, %s121
      %p130 = scmp.eq.s32.totalorder %s26, 0
      %p131 = por %p129, %p130
      %p132 = scmp.ne.s32.totalorder %s120, %s121
      %p133 = scmp.eq.s32.totalorder %s27, 1
      %p134 = por %p132, %p133
      %p136 = scmp.ne.s32.totalorder %s121, %s135
      %p137 = scmp.eq.s32.totalorder %s27, 0
      %p138 = por %p136, %p137
      %s140 = sadd.s32 %s139, 1
      %p143 = scmp.eq.s32.totalorder %s21, 1
      %p144 = scmp.ne.s32.totalorder %s139, %s141
      %p145 = scmp.eq.s32.totalorder %s21, 0
      %p146 = por %p144, %p145
      %p147 = scmp.ne.s32.totalorder %s139, %s141
      %p148 = scmp.eq.s32.totalorder %s26, 1
      %p149 = por %p147, %p148
      %p150 = scmp.ne.s32.totalorder %s141, %s142
      %p151 = scmp.eq.s32.totalorder %s26, 0
      %p152 = por %p150, %p151
      %p153 = scmp.ne.s32.totalorder %s141, %s142
      %p154 = scmp.eq.s32.totalorder %s27, 1
      %p155 = por %p153, %p154
      %p157 = scmp.ne.s32.totalorder %s142, %s156
      %p158 = scmp.eq.s32.totalorder %s27, 0
      %p159 = por %p157, %p158
      %s160 = ssub.s32 %s21, %s28
      %p161 = scmp.eq.s32.totalorder %s160, 0
      %s163 = sadd.s32 %s162, 1
      %s164 = scalar_select %p161, %s162, %s163
      %p167 = pneg %p161
      %p168 = scmp.eq.s32.totalorder %s21, 1
      %p169 = por %p167, %p168
      %p170 = scmp.ne.s32.totalorder %s162, %s165
      %p171 = scmp.eq.s32.totalorder %s21, 0
      %p172 = por %p170, %p171
      %p173 = scmp.ne.s32.totalorder %s162, %s165
      %p174 = scmp.eq.s32.totalorder %s26, 1
      %p175 = por %p173, %p174
      %p176 = scmp.ne.s32.totalorder %s165, %s166
      %p177 = scmp.eq.s32.totalorder %s26, 0
      %p178 = por %p176, %p177
      %p179 = scmp.ne.s32.totalorder %s165, %s166
      %p180 = scmp.eq.s32.totalorder %s27, 1
      %p181 = por %p179, %p180
      %p183 = scmp.ne.s32.totalorder %s166, %s182
      %p184 = scmp.eq.s32.totalorder %s27, 0
      %p185 = por %p183, %p184
      %p186 = scmp.le.s32.totalorder 1, %s21
      %p187 = scmp.lt.s32.totalorder %s21, 3
      %p188 = pnand %p186, %p187
      %p189 = pneg %p188
      // Predicated region
      $region9: #{tpu_custom_call.1} parent=5 // pred_check
        _
      $region10: #{tpu_custom_call.1} parent=5 // pred_check_branch
        %191 = sbr.rel (%p188) target = $region12
      $region11: #{tpu_custom_call.1} parent=5 // pred_region
        %s192 = ssub.s32 %s21, 1
        // Predicated region
        $region13: #{tpu_custom_call.1} parent=11 // pred_check
          %p193 = pneg %p68
        $region14: #{tpu_custom_call.1} parent=11 // pred_check_branch
          %195 = sbr.rel (%p193) target = $region16
        $region15: #{tpu_custom_call.1} parent=11 // pred_region
          %s197 = ssub.s32 4096, 4096
          %198 = vsyncadd [#allocation6], %s197
          %s199 = sshll.u32 [#allocation5], 4
          %s200 = int_to_ptr.vmem [resolvable:$true] %s199
          %205 = dma.hbm_to_vmem [thread:$0]  %s1, 4096, %s200, [#allocation6], 256, 256, 16
        $region16: #{tpu_custom_call.1} parent=11 // pred_fallthru
          _
        // Predicated region
        $region17: #{tpu_custom_call.1} parent=11 // pred_check
          %p206 = pneg %p89
        $region18: #{tpu_custom_call.1} parent=11 // pred_check_branch
          %208 = sbr.rel (%p206) target = $region20
        $region19: #{tpu_custom_call.1} parent=11 // pred_region
          %s210 = ssub.s32 16384, 16384
          %211 = vsyncadd [#allocation6], %s210
          %s212 = sshll.u32 [#allocation7], 4
          %s213 = int_to_ptr.vmem [resolvable:$true] %s212
          %218 = dma.hbm_to_vmem [thread:$0]  %s2, 16384, %s213, [#allocation6], 256, 256, 16
        $region20: #{tpu_custom_call.1} parent=11 // pred_fallthru
          _
        // Predicated region
        $region21: #{tpu_custom_call.1} parent=11 // pred_check
          %p219 = pneg %p110
        $region22: #{tpu_custom_call.1} parent=11 // pred_check_branch
          %221 = sbr.rel (%p219) target = $region24
        $region23: #{tpu_custom_call.1} parent=11 // pred_region
          %s223 = ssub.s32 16384, 16384
          %224 = vsyncadd [#allocation9], %s223
          %s225 = sshll.u32 [#allocation8], 4
          %s226 = int_to_ptr.vmem [resolvable:$true] %s225
          %231 = dma.hbm_to_vmem [thread:$0]  %s3, 16384, %s226, [#allocation9], 256, 256, 16
        $region24: #{tpu_custom_call.1} parent=11 // pred_fallthru
          _
        // Predicated region
        $region25: #{tpu_custom_call.1} parent=11 // pred_check
          %p232 = pneg %p131
        $region26: #{tpu_custom_call.1} parent=11 // pred_check_branch
          %234 = sbr.rel (%p232) target = $region28
        $region27: #{tpu_custom_call.1} parent=11 // pred_region
          %s236 = ssub.s32 4096, 4096
          %237 = vsyncadd [#allocation9], %s236
          %s238 = sshll.u32 [#allocation10], 4
          %s239 = int_to_ptr.vmem [resolvable:$true] %s238
          %244 = dma.hbm_to_vmem [thread:$0]  %s4, 4096, %s239, [#allocation9], 128, 128, 8
        $region28: #{tpu_custom_call.1} parent=11 // pred_fallthru
          _
        // Predicated region
        $region29: #{tpu_custom_call.1} parent=11 // pred_check
          %p245 = pneg %p152
        $region30: #{tpu_custom_call.1} parent=11 // pred_check_branch
          %247 = sbr.rel (%p245) target = $region32
        $region31: #{tpu_custom_call.1} parent=11 // pred_region
          %s249 = ssub.s32 8192, 8192
          %250 = vsyncadd [#allocation12], %s249
          %s251 = sshll.u32 [#allocation11], 4
          %s252 = int_to_ptr.vmem [resolvable:$true] %s251
          %257 = dma.hbm_to_vmem [thread:$0]  %s5, 8192, %s252, [#allocation12], 256, 256, 16
        $region32: #{tpu_custom_call.1} parent=11 // pred_fallthru
          _
      $region12: #{tpu_custom_call.1} parent=5 // pred_fallthru
        _
      %p258 = scmp.lt.s32.totalorder %s21, 2
      // Predicated region
      $region33: #{tpu_custom_call.1} parent=5 // pred_check
        %p259 = pneg %p258
      $region34: #{tpu_custom_call.1} parent=5 // pred_check_branch
        %261 = sbr.rel (%p259) target = $region36
      $region35: #{tpu_custom_call.1} parent=5 // pred_region
        // Predicated region
        $region37: #{tpu_custom_call.1} parent=35 // pred_check
          %p262 = pneg %p41
        $region38: #{tpu_custom_call.1} parent=35 // pred_check_branch
          %264 = sbr.rel (%p262) target = $region40
        $region39: #{tpu_custom_call.1} parent=35 // pred_region
          %s265 = sand.u32 %s31, 1
          %s266 = scalar_lea.sflag [#allocation3], %s265
          %s267 = sand.u32 %s31, 1
          %s268 = smul.addr %s267, 16
          %s269 = scalar_lea.vmem [#allocation2], %s268
          %s270 = smul.u32 2, %s21
          %s272 = ssub.s32 256, 256
          %273 = vsyncadd %s266, %s272
          %s274 = smul.addr %s270, 128
          %s275 = scalar_lea.hbm %s0, %s274
          %s276 = sshll.u32 %s269, 4
          %s277 = int_to_ptr.vmem [resolvable:$true] %s276
          %282 = dma.hbm_to_vmem [thread:$0]  %s275, 256, %s277, %s266, 128, 128, 8
        $region40: #{tpu_custom_call.1} parent=35 // pred_fallthru
          _
      $region36: #{tpu_custom_call.1} parent=5 // pred_fallthru
        _
      %p283 = scmp.le.s32.totalorder 1, %s21
      %p284 = scmp.lt.s32.totalorder %s21, 3
      %p285 = pnand %p283, %p284
      %p286 = pneg %p285
      // Predicated region
      $region41: #{tpu_custom_call.1} parent=5 // pred_check
        _
      $region42: #{tpu_custom_call.1} parent=5 // pred_check_branch
        %288 = sbr.rel (%p285) target = $region44
      $region43: #{tpu_custom_call.1} parent=5 // pred_region
        %s289 = ssub.s32 %s21, 1
        %s290 = sand.u32 %s34, 1
        %s291 = scalar_lea.sflag [#allocation3], %s290
        %s292 = sand.u32 %s34, 1
        %s293 = smul.addr %s292, 16
        %s294 = scalar_lea.vmem [#allocation2], %s293
        // Predicated region
        $region45: #{tpu_custom_call.1} parent=43 // pred_check
          %p295 = pneg %p47
        $region46: #{tpu_custom_call.1} parent=43 // pred_check_branch
          %297 = sbr.rel (%p295) target = $region48
        $region47: #{tpu_custom_call.1} parent=43 // pred_region
          %298 = dma.done %s291, 256
        $region48: #{tpu_custom_call.1} parent=43 // pred_fallthru
          _
        // Predicated region
        $region49: #{tpu_custom_call.1} parent=43 // pred_check
          %p299 = pneg %p68
        $region50: #{tpu_custom_call.1} parent=43 // pred_check_branch
          %301 = sbr.rel (%p299) target = $region52
        $region51: #{tpu_custom_call.1} parent=43 // pred_region
          %302 = dma.done [#allocation6], 4096
        $region52: #{tpu_custom_call.1} parent=43 // pred_fallthru
          _
        // Predicated region
        $region53: #{tpu_custom_call.1} parent=43 // pred_check
          %p303 = pneg %p89
        $region54: #{tpu_custom_call.1} parent=43 // pred_check_branch
          %305 = sbr.rel (%p303) target = $region56
        $region55: #{tpu_custom_call.1} parent=43 // pred_region
          %306 = dma.done [#allocation6], 16384
        $region56: #{tpu_custom_call.1} parent=43 // pred_fallthru
          _
        // Predicated region
        $region57: #{tpu_custom_call.1} parent=43 // pred_check
          %p307 = pneg %p110
        $region58: #{tpu_custom_call.1} parent=43 // pred_check_branch
          %309 = sbr.rel (%p307) target = $region60
        $region59: #{tpu_custom_call.1} parent=43 // pred_region
          %310 = dma.done [#allocation9], 16384
        $region60: #{tpu_custom_call.1} parent=43 // pred_fallthru
          _
        // Predicated region
        $region61: #{tpu_custom_call.1} parent=43 // pred_check
          %p311 = pneg %p131
        $region62: #{tpu_custom_call.1} parent=43 // pred_check_branch
          %313 = sbr.rel (%p311) target = $region64
        $region63: #{tpu_custom_call.1} parent=43 // pred_region
          %314 = dma.done [#allocation9], 4096
        $region64: #{tpu_custom_call.1} parent=43 // pred_fallthru
          _
        // Predicated region
        $region65: #{tpu_custom_call.1} parent=43 // pred_check
          %p315 = pneg %p152
        $region66: #{tpu_custom_call.1} parent=43 // pred_check_branch
          %317 = sbr.rel (%p315) target = $region68
        $region67: #{tpu_custom_call.1} parent=43 // pred_region
          %318 = dma.done [#allocation12], 8192
        $region68: #{tpu_custom_call.1} parent=43 // pred_fallthru
          _
        %s319 = sand.u32 %s34, 1
        %s320 = scalar_lea.sflag [#allocation3], %s319
        %s321 = sand.u32 %s34, 1
        %s322 = smul.addr %s321, 16
        %s323 = scalar_lea.vmem [#allocation2], %s322
        %p324 = pneg %p47
        %p325 = pneg %p44
        %p326 = pneg %p68
        %p327 = pneg %p65
        %p328 = pneg %p89
        %p329 = pneg %p86
        %p330 = pneg %p110
        %p331 = pneg %p107
        %p332 = pneg %p131
        %p333 = pneg %p128
        %p334 = pneg %p152
        %p335 = pneg %p149
        %p336 = pneg %p178
        %p337 = pneg %p175
        %s338 = sand.u32 %s165, 1
        %s339 = scalar_lea.sflag [#allocation4], %s338
        %s340 = sand.u32 %s165, 1
        %s341 = smul.addr %s340, 16
        %s342 = scalar_lea.vmem [#allocation13], %s341
        %s343 = smul.u32 2, %s26
        %s344 = smul.u32 2, %s26
        %v345 = vld [vmem:[#allocation11] sm:$0xff]
        %v346 = vld [vmem:[#allocation11 + $0x8] sm:$0xff]
        %v347 = vld [vmem:[#allocation11 + $0x10] sm:$0xff]
        %v348 = vld [vmem:[#allocation11 + $0x18] sm:$0xff]
        %v349 = vld [vmem:[#allocation11 + $0x20] sm:$0xff]
        %v350 = vld [vmem:[#allocation11 + $0x28] sm:$0xff]
        %v351 = vld [vmem:[#allocation11 + $0x30] sm:$0xff]
        %v352 = vld [vmem:[#allocation11 + $0x38] sm:$0xff]
        %v353 = vld [vmem:[#allocation11 + $0x40] sm:$0xff]
        %v354 = vld [vmem:[#allocation11 + $0x48] sm:$0xff]
        %v355 = vld [vmem:[#allocation11 + $0x50] sm:$0xff]
        %v356 = vld [vmem:[#allocation11 + $0x58] sm:$0xff]
        %v357 = vld [vmem:[#allocation11 + $0x60] sm:$0xff]
        %v358 = vld [vmem:[#allocation11 + $0x68] sm:$0xff]
        %v359 = vld [vmem:[#allocation11 + $0x70] sm:$0xff]
        %v360 = vld [vmem:[#allocation11 + $0x78] sm:$0xff]
        %v361 = vld [vmem:[#allocation11 + $0x80] sm:$0xff]
        %v362 = vld [vmem:[#allocation11 + $0x88] sm:$0xff]
        %v363 = vld [vmem:[#allocation11 + $0x90] sm:$0xff]
        %v364 = vld [vmem:[#allocation11 + $0x98] sm:$0xff]
        %v365 = vld [vmem:[#allocation11 + $0xa0] sm:$0xff]
        %v366 = vld [vmem:[#allocation11 + $0xa8] sm:$0xff]
        %v367 = vld [vmem:[#allocation11 + $0xb0] sm:$0xff]
        %v368 = vld [vmem:[#allocation11 + $0xb8] sm:$0xff]
        %v369 = vld [vmem:[#allocation11 + $0xc0] sm:$0xff]
        %v370 = vld [vmem:[#allocation11 + $0xc8] sm:$0xff]
        %v371 = vld [vmem:[#allocation11 + $0xd0] sm:$0xff]
        %v372 = vld [vmem:[#allocation11 + $0xd8] sm:$0xff]
        %v373 = vld [vmem:[#allocation11 + $0xe0] sm:$0xff]
        %v374 = vld [vmem:[#allocation11 + $0xe8] sm:$0xff]
        %v375 = vld [vmem:[#allocation11 + $0xf0] sm:$0xff]
        %v376 = vld [vmem:[#allocation11 + $0xf8] sm:$0xff]
        %v377 = vld [vmem:[#allocation11 + $0x100] sm:$0xff]
        %v378 = vld [vmem:[#allocation11 + $0x108] sm:$0xff]
        %v379 = vld [vmem:[#allocation11 + $0x110] sm:$0xff]
        %v380 = vld [vmem:[#allocation11 + $0x118] sm:$0xff]
        %v381 = vld [vmem:[#allocation11 + $0x120] sm:$0xff]
        %v382 = vld [vmem:[#allocation11 + $0x128] sm:$0xff]
        %v383 = vld [vmem:[#allocation11 + $0x130] sm:$0xff]
        %v384 = vld [vmem:[#allocation11 + $0x138] sm:$0xff]
        %v385 = vld [vmem:[#allocation11 + $0x140] sm:$0xff]
        %v386 = vld [vmem:[#allocation11 + $0x148] sm:$0xff]
        %v387 = vld [vmem:[#allocation11 + $0x150] sm:$0xff]
        %v388 = vld [vmem:[#allocation11 + $0x158] sm:$0xff]
        %v389 = vld [vmem:[#allocation11 + $0x160] sm:$0xff]
        %v390 = vld [vmem:[#allocation11 + $0x168] sm:$0xff]
        %v391 = vld [vmem:[#allocation11 + $0x170] sm:$0xff]
        %v392 = vld [vmem:[#allocation11 + $0x178] sm:$0xff]
        %v393 = vld [vmem:[#allocation11 + $0x180] sm:$0xff]
        %v394 = vld [vmem:[#allocation11 + $0x188] sm:$0xff]
        %v395 = vld [vmem:[#allocation11 + $0x190] sm:$0xff]
        %v396 = vld [vmem:[#allocation11 + $0x198] sm:$0xff]
        %v397 = vld [vmem:[#allocation11 + $0x1a0] sm:$0xff]
        %v398 = vld [vmem:[#allocation11 + $0x1a8] sm:$0xff]
        %v399 = vld [vmem:[#allocation11 + $0x1b0] sm:$0xff]
        %v400 = vld [vmem:[#allocation11 + $0x1b8] sm:$0xff]
        %v401 = vld [vmem:[#allocation11 + $0x1c0] sm:$0xff]
        %v402 = vld [vmem:[#allocation11 + $0x1c8] sm:$0xff]
        %v403 = vld [vmem:[#allocation11 + $0x1d0] sm:$0xff]
        %v404 = vld [vmem:[#allocation11 + $0x1d8] sm:$0xff]
        %v405 = vld [vmem:[#allocation11 + $0x1e0] sm:$0xff]
        %v406 = vld [vmem:[#allocation11 + $0x1e8] sm:$0xff]
        %v407 = vld [vmem:[#allocation11 + $0x1f0] sm:$0xff]
        %v408 = vld [vmem:[#allocation11 + $0x1f8] sm:$0xff]
        %v409 = vld [vmem:[%s294] sm:$0xff]
        %v410 = vld [vmem:[%s294 + $0x8] sm:$0xff]
        %v411 = vld [vmem:[#allocation5] sm:$0xff]
        %v412 = vld [vmem:[#allocation5 + $0x8] sm:$0xff]
        %v413 = vld [vmem:[#allocation5 + $0x10] sm:$0xff]
        %v414 = vld [vmem:[#allocation5 + $0x18] sm:$0xff]
        %v415 = vld [vmem:[#allocation5 + $0x20] sm:$0xff]
        %v416 = vld [vmem:[#allocation5 + $0x28] sm:$0xff]
        %v417 = vld [vmem:[#allocation5 + $0x30] sm:$0xff]
        %v418 = vld [vmem:[#allocation5 + $0x38] sm:$0xff]
        %v419 = vld [vmem:[#allocation5 + $0x40] sm:$0xff]
        %v420 = vld [vmem:[#allocation5 + $0x48] sm:$0xff]
        %v421 = vld [vmem:[#allocation5 + $0x50] sm:$0xff]
        %v422 = vld [vmem:[#allocation5 + $0x58] sm:$0xff]
        %v423 = vld [vmem:[#allocation5 + $0x60] sm:$0xff]
        %v424 = vld [vmem:[#allocation5 + $0x68] sm:$0xff]
        %v425 = vld [vmem:[#allocation5 + $0x70] sm:$0xff]
        %v426 = vld [vmem:[#allocation5 + $0x78] sm:$0xff]
        %v427 = vld [vmem:[#allocation5 + $0x80] sm:$0xff]
        %v428 = vld [vmem:[#allocation5 + $0x88] sm:$0xff]
        %v429 = vld [vmem:[#allocation5 + $0x90] sm:$0xff]
        %v430 = vld [vmem:[#allocation5 + $0x98] sm:$0xff]
        %v431 = vld [vmem:[#allocation5 + $0xa0] sm:$0xff]
        %v432 = vld [vmem:[#allocation5 + $0xa8] sm:$0xff]
        %v433 = vld [vmem:[#allocation5 + $0xb0] sm:$0xff]
        %v434 = vld [vmem:[#allocation5 + $0xb8] sm:$0xff]
        %v435 = vld [vmem:[#allocation5 + $0xc0] sm:$0xff]
        %v436 = vld [vmem:[#allocation5 + $0xc8] sm:$0xff]
        %v437 = vld [vmem:[#allocation5 + $0xd0] sm:$0xff]
        %v438 = vld [vmem:[#allocation5 + $0xd8] sm:$0xff]
        %v439 = vld [vmem:[#allocation5 + $0xe0] sm:$0xff]
        %v440 = vld [vmem:[#allocation5 + $0xe8] sm:$0xff]
        %v441 = vld [vmem:[#allocation5 + $0xf0] sm:$0xff]
        %v442 = vld [vmem:[#allocation5 + $0xf8] sm:$0xff]
        %443 = vmatprep.subr.mxu0 %v412
        %444 = vmatpush1.msra.mxu0 %v411
        %445 = vmatprep.subr.mxu0 %v414
        %446 = vmatpush1.msra.mxu0 %v413
        %447 = vmatprep.subr.mxu0 %v416
        %448 = vmatpush1.msra.mxu0 %v415
        %449 = vmatprep.subr.mxu0 %v418
        %450 = vmatpush1.msra.mxu0 %v417
        %451 = vmatprep.subr.mxu0 %v420
        %452 = vmatpush1.msra.mxu0 %v419
        %453 = vmatprep.subr.mxu0 %v422
        %454 = vmatpush1.msra.mxu0 %v421
        %455 = vmatprep.subr.mxu0 %v424
        %456 = vmatpush1.msra.mxu0 %v423
        %457 = vmatprep.subr.mxu0 %v426
        %458 = vmatpush1.msra.mxu0 %v425
        %459 = vmatprep.subr.mxu0 %v428
        %460 = vmatpush1.msra.mxu0 %v427
        %461 = vmatprep.subr.mxu0 %v430
        %462 = vmatpush1.msra.mxu0 %v429
        %463 = vmatprep.subr.mxu0 %v432
        %464 = vmatpush1.msra.mxu0 %v431
        %465 = vmatprep.subr.mxu0 %v434
        %466 = vmatpush1.msra.mxu0 %v433
        %467 = vmatprep.subr.mxu0 %v436
        %468 = vmatpush1.msra.mxu0 %v435
        %469 = vmatprep.subr.mxu0 %v438
        %470 = vmatpush1.msra.mxu0 %v437
        %471 = vmatprep.subr.mxu0 %v440
        %472 = vmatpush1.msra.mxu0 %v439
        %473 = vmatprep.subr.mxu0 %v442
        %474 = vmatpush1.msra.mxu0 %v441
        %475 = vmatprep.subr.mxu0 0.0
        %476 = vmatpush1.msra.mxu0 0.0
        %477 = vmatprep.subr.mxu0 0.0
        %478 = vmatpush1.msra.mxu0 0.0
        %479 = vmatprep.subr.mxu0 0.0
        %480 = vmatpush1.msra.mxu0 0.0
        %481 = vmatprep.subr.mxu0 0.0
        %482 = vmatpush1.msra.mxu0 0.0
        %483 = vmatprep.subr.mxu0 0.0
        %484 = vmatpush1.msra.mxu0 0.0
        %485 = vmatprep.subr.mxu0 0.0
        %486 = vmatpush1.msra.mxu0 0.0
        %487 = vmatprep.subr.mxu0 0.0
        %488 = vmatpush1.msra.mxu0 0.0
        %489 = vmatprep.subr.mxu0 0.0
        %490 = vmatpush1.msra.mxu0 0.0
        %491 = vmatprep.subr.mxu0 0.0
        %492 = vmatpush1.msra.mxu0 0.0
        %493 = vmatprep.subr.mxu0 0.0
        %494 = vmatpush1.msra.mxu0 0.0
        %495 = vmatprep.subr.mxu0 0.0
        %496 = vmatpush1.msra.mxu0 0.0
        %497 = vmatprep.subr.mxu0 0.0
        %498 = vmatpush1.msra.mxu0 0.0
        %499 = vmatprep.subr.mxu0 0.0
        %500 = vmatpush1.msra.mxu0 0.0
        %501 = vmatprep.subr.mxu0 0.0
        %502 = vmatpush1.msra.mxu0 0.0
        %503 = vmatprep.subr.mxu0 0.0
        %504 = vmatpush1.msra.mxu0 0.0
        %505 = vmatprep.subr.mxu0 0.0
        %506 = vmatpush1.msra.mxu0 0.0
        %507 = vmatprep.mubr.f32.mxu0 0.0
        %508 = vmatmul.mubr.f32.gmra.mrb[0].mxu0 %v409
        %v509 = vpop.f32.mrb[0].mxu0
        %v510 = vadd.f32 0.0, %v509
        %v511 = vpop.f32.mrb[0].mxu0
        %v512 = vadd.f32 0.0, %v511
        %513 = vmatprep.mubr.f32.mxu0 0.0
        %514 = vmatmul.mubr.f32.gmra.mrb[0].mxu0 %v410
        %v515 = vpop.f32.mrb[0].mxu0
        %v516 = vadd.f32 0.0, %v515
        %v517 = vpop.f32.mrb[0].mxu0
        %v518 = vadd.f32 0.0, %v517
        %519 = vdwg.mxu0
        %520 = vmatprep.subr.mxu0 %v346
        %521 = vmatpush1.msra.mxu0 %v345
        %522 = vmatprep.subr.mxu0 %v348
        %523 = vmatpush1.msra.mxu0 %v347
        %524 = vmatprep.subr.mxu0 %v350
        %525 = vmatpush1.msra.mxu0 %v349
        %526 = vmatprep.subr.mxu0 %v352
        %527 = vmatpush1.msra.mxu0 %v351
        %528 = vmatprep.subr.mxu0 %v354
        %529 = vmatpush1.msra.mxu0 %v353
        %530 = vmatprep.subr.mxu0 %v356
        %531 = vmatpush1.msra.mxu0 %v355
        %532 = vmatprep.subr.mxu0 %v358
        %533 = vmatpush1.msra.mxu0 %v357
        %534 = vmatprep.subr.mxu0 %v360
        %535 = vmatpush1.msra.mxu0 %v359
        %536 = vmatprep.subr.mxu0 %v362
        %537 = vmatpush1.msra.mxu0 %v361
        %538 = vmatprep.subr.mxu0 %v364
        %539 = vmatpush1.msra.mxu0 %v363
        %540 = vmatprep.subr.mxu0 %v366
        %541 = vmatpush1.msra.mxu0 %v365
        %542 = vmatprep.subr.mxu0 %v368
        %543 = vmatpush1.msra.mxu0 %v367
        %544 = vmatprep.subr.mxu0 %v370
        %545 = vmatpush1.msra.mxu0 %v369
        %546 = vmatprep.subr.mxu0 %v372
        %547 = vmatpush1.msra.mxu0 %v371
        %548 = vmatprep.subr.mxu0 %v374
        %549 = vmatpush1.msra.mxu0 %v373
        %550 = vmatprep.subr.mxu0 %v376
        %551 = vmatpush1.msra.mxu0 %v375
        %552 = vmatprep.subr.mxu0 %v378
        %553 = vmatpush1.msra.mxu0 %v377
        %554 = vmatprep.subr.mxu0 %v380
        %555 = vmatpush1.msra.mxu0 %v379
        %556 = vmatprep.subr.mxu0 %v382
        %557 = vmatpush1.msra.mxu0 %v381
        %558 = vmatprep.subr.mxu0 %v384
        %559 = vmatpush1.msra.mxu0 %v383
        %560 = vmatprep.subr.mxu0 %v386
        %561 = vmatpush1.msra.mxu0 %v385
        %562 = vmatprep.subr.mxu0 %v388
        %563 = vmatpush1.msra.mxu0 %v387
        %564 = vmatprep.subr.mxu0 %v390
        %565 = vmatpush1.msra.mxu0 %v389
        %566 = vmatprep.subr.mxu0 %v392
        %567 = vmatpush1.msra.mxu0 %v391
        %568 = vmatprep.subr.mxu0 %v394
        %569 = vmatpush1.msra.mxu0 %v393
        %570 = vmatprep.subr.mxu0 %v396
        %571 = vmatpush1.msra.mxu0 %v395
        %572 = vmatprep.subr.mxu0 %v398
        %573 = vmatpush1.msra.mxu0 %v397
        %574 = vmatprep.subr.mxu0 %v400
        %575 = vmatpush1.msra.mxu0 %v399
        %576 = vmatprep.subr.mxu0 %v402
        %577 = vmatpush1.msra.mxu0 %v401
        %578 = vmatprep.subr.mxu0 %v404
        %579 = vmatpush1.msra.mxu0 %v403
        %580 = vmatprep.subr.mxu0 %v406
        %581 = vmatpush1.msra.mxu0 %v405
        %582 = vmatprep.subr.mxu0 %v408
        %583 = vmatpush1.msra.mxu0 %v407
        %584 = vmatprep.mubr.f32.mxu0 %v512
        %585 = vmatmul.mubr.f32.gmra.mrb[0].mxu0 %v510
        %v586 = vpop.f32.mrb[0].mxu0
        %v587 = vadd.f32 0.0, %v586
        %v588 = vpop.f32.mrb[0].mxu0
        %v589 = vadd.f32 0.0, %v588
        %590 = vmatprep.mubr.f32.mxu0 %v518
        %591 = vmatmul.mubr.f32.gmra.mrb[0].mxu0 %v516
        %v592 = vpop.f32.mrb[0].mxu0
        %v593 = vadd.f32 0.0, %v592
        %v594 = vpop.f32.mrb[0].mxu0
        %v595 = vadd.f32 0.0, %v594
        %596 = vdwg.mxu0
        %v597 = vmul.f32 %v510, %v510
        %v598 = vmul.f32 %v512, %v512
        %v599 = vmul.f32 %v516, %v516
        %v600 = vmul.f32 %v518, %v518
        %601 = vmatprep.subr.mxu0 %v346
        %602 = vmatpush1.msra.mxu0 %v345
        %603 = vmatprep.subr.mxu0 %v348
        %604 = vmatpush1.msra.mxu0 %v347
        %605 = vmatprep.subr.mxu0 %v350
        %606 = vmatpush1.msra.mxu0 %v349
        %607 = vmatprep.subr.mxu0 %v352
        %608 = vmatpush1.msra.mxu0 %v351
        %609 = vmatprep.subr.mxu0 %v354
        %610 = vmatpush1.msra.mxu0 %v353
        %611 = vmatprep.subr.mxu0 %v356
        %612 = vmatpush1.msra.mxu0 %v355
        %613 = vmatprep.subr.mxu0 %v358
        %614 = vmatpush1.msra.mxu0 %v357
        %615 = vmatprep.subr.mxu0 %v360
        %616 = vmatpush1.msra.mxu0 %v359
        %617 = vmatprep.subr.mxu0 %v362
        %618 = vmatpush1.msra.mxu0 %v361
        %619 = vmatprep.subr.mxu0 %v364
        %620 = vmatpush1.msra.mxu0 %v363
        %621 = vmatprep.subr.mxu0 %v366
        %622 = vmatpush1.msra.mxu0 %v365
        %623 = vmatprep.subr.mxu0 %v368
        %624 = vmatpush1.msra.mxu0 %v367
        %625 = vmatprep.subr.mxu0 %v370
        %626 = vmatpush1.msra.mxu0 %v369
        %627 = vmatprep.subr.mxu0 %v372
        %628 = vmatpush1.msra.mxu0 %v371
        %629 = vmatprep.subr.mxu0 %v374
        %630 = vmatpush1.msra.mxu0 %v373
        %631 = vmatprep.subr.mxu0 %v376
        %632 = vmatpush1.msra.mxu0 %v375
        %633 = vmatprep.subr.mxu0 %v378
        %634 = vmatpush1.msra.mxu0 %v377
        %635 = vmatprep.subr.mxu0 %v380
        %636 = vmatpush1.msra.mxu0 %v379
        %637 = vmatprep.subr.mxu0 %v382
        %638 = vmatpush1.msra.mxu0 %v381
        %639 = vmatprep.subr.mxu0 %v384
        %640 = vmatpush1.msra.mxu0 %v383
        %641 = vmatprep.subr.mxu0 %v386
        %642 = vmatpush1.msra.mxu0 %v385
        %643 = vmatprep.subr.mxu0 %v388
        %644 = vmatpush1.msra.mxu0 %v387
        %645 = vmatprep.subr.mxu0 %v390
        %646 = vmatpush1.msra.mxu0 %v389
        %647 = vmatprep.subr.mxu0 %v392
        %648 = vmatpush1.msra.mxu0 %v391
        %649 = vmatprep.subr.mxu0 %v394
        %650 = vmatpush1.msra.mxu0 %v393
        %651 = vmatprep.subr.mxu0 %v396
        %652 = vmatpush1.msra.mxu0 %v395
        %653 = vmatprep.subr.mxu0 %v398
        %654 = vmatpush1.msra.mxu0 %v397
        %655 = vmatprep.subr.mxu0 %v400
        %656 = vmatpush1.msra.mxu0 %v399
        %657 = vmatprep.subr.mxu0 %v402
        %658 = vmatpush1.msra.mxu0 %v401
        %659 = vmatprep.subr.mxu0 %v404
        %660 = vmatpush1.msra.mxu0 %v403
        %661 = vmatprep.subr.mxu0 %v406
        %662 = vmatpush1.msra.mxu0 %v405
        %663 = vmatprep.subr.mxu0 %v408
        %664 = vmatpush1.msra.mxu0 %v407
        %665 = vmatprep.mubr.f32.mxu0 %v598
        %666 = vmatmul.mubr.f32.gmra.mrb[0].mxu0 %v597
        %v667 = vpop.f32.mrb[0].mxu0
        %v668 = vadd.f32 0.0, %v667
        %v669 = vpop.f32.mrb[0].mxu0
        %v670 = vadd.f32 0.0, %v669
        %671 = vmatprep.mubr.f32.mxu0 %v600
        %672 = vmatmul.mubr.f32.gmra.mrb[0].mxu0 %v599
        %v673 = vpop.f32.mrb[0].mxu0
        %v674 = vadd.f32 0.0, %v673
        %v675 = vpop.f32.mrb[0].mxu0
        %v676 = vadd.f32 0.0, %v675
        %677 = vdwg.mxu0
        %v678 = vmul.f32 %v587, 0.03125
        %v679 = vmul.f32 %v589, 0.03125
        %v680 = vmul.f32 %v593, 0.03125
        %v681 = vmul.f32 %v595, 0.03125
        %v682 = vmul.f32 %v668, 0.03125
        %v683 = vmul.f32 %v670, 0.03125
        %v684 = vmul.f32 %v674, 0.03125
        %v685 = vmul.f32 %v676, 0.03125
        %v686 = vmul.f32 %v678, %v678
        %v687 = vmul.f32 %v679, %v679
        %v688 = vmul.f32 %v680, %v680
        %v689 = vmul.f32 %v681, %v681
        %v690 = vsub.f32 %v682, %v686
        %v691 = vsub.f32 %v683, %v687
        %v692 = vsub.f32 %v684, %v688
        %v693 = vsub.f32 %v685, %v689
        %v694 = vmax.f32 %v690, 0.0
        %v695 = vmax.f32 %v691, 0.0
        %v696 = vmax.f32 %v692, 0.0
        %v697 = vmax.f32 %v693, 0.0
        %v698 = vsub.f32 %v510, %v678
        %v699 = vsub.f32 %v512, %v679
        %v700 = vsub.f32 %v516, %v680
        %v701 = vsub.f32 %v518, %v681
        %v702 = vadd.f32 %v694, 1e-05
        %v703 = vadd.f32 %v695, 1e-05
        %v704 = vadd.f32 %v696, 1e-05
        %v705 = vadd.f32 %v697, 1e-05
        %v706 = vrsqrt.pop %v702
        %v707 = vrsqrt.pop %v703
        %v708 = vrsqrt.pop %v704
        %v709 = vrsqrt.pop %v705
        %v710 = vmul.f32 %v698, %v706
        %v711 = vmul.f32 %v699, %v707
        %v712 = vmul.f32 %v700, %v708
        %v713 = vmul.f32 %v701, %v709
        %v714 = vtanh.pop %v710
        %v715 = vtanh.pop %v711
        %v716 = vtanh.pop %v712
        %v717 = vtanh.pop %v713
        %v718 = vld [vmem:[#allocation7] sm:$0xff]
        %v719 = vld [vmem:[#allocation7 + $0x8] sm:$0xff]
        %v720 = vld [vmem:[#allocation7 + $0x10] sm:$0xff]
        %v721 = vld [vmem:[#allocation7 + $0x18] sm:$0xff]
        %v722 = vld [vmem:[#allocation7 + $0x20] sm:$0xff]
        %v723 = vld [vmem:[#allocation7 + $0x28] sm:$0xff]
        %v724 = vld [vmem:[#allocation7 + $0x30] sm:$0xff]
        %v725 = vld [vmem:[#allocation7 + $0x38] sm:$0xff]
        %v726 = vld [vmem:[#allocation7 + $0x40] sm:$0xff]
        %v727 = vld [vmem:[#allocation7 + $0x48] sm:$0xff]
        %v728 = vld [vmem:[#allocation7 + $0x50] sm:$0xff]
        %v729 = vld [vmem:[#allocation7 + $0x58] sm:$0xff]
        %v730 = vld [vmem:[#allocation7 + $0x60] sm:$0xff]
        %v731 = vld [vmem:[#allocation7 + $0x68] sm:$0xff]
        %v732 = vld [vmem:[#allocation7 + $0x70] sm:$0xff]
        %v733 = vld [vmem:[#allocation7 + $0x78] sm:$0xff]
        %v734 = vld [vmem:[#allocation7 + $0x80] sm:$0xff]
        %v735 = vld [vmem:[#allocation7 + $0x88] sm:$0xff]
        %v736 = vld [vmem:[#allocation7 + $0x90] sm:$0xff]
        %v737 = vld [vmem:[#allocation7 + $0x98] sm:$0xff]
        %v738 = vld [vmem:[#allocation7 + $0xa0] sm:$0xff]
        %v739 = vld [vmem:[#allocation7 + $0xa8] sm:$0xff]
        %v740 = vld [vmem:[#allocation7 + $0xb0] sm:$0xff]
        %v741 = vld [vmem:[#allocation7 + $0xb8] sm:$0xff]
        %v742 = vld [vmem:[#allocation7 + $0xc0] sm:$0xff]
        %v743 = vld [vmem:[#allocation7 + $0xc8] sm:$0xff]
        %v744 = vld [vmem:[#allocation7 + $0xd0] sm:$0xff]
        %v745 = vld [vmem:[#allocation7 + $0xd8] sm:$0xff]
        %v746 = vld [vmem:[#allocation7 + $0xe0] sm:$0xff]
        %v747 = vld [vmem:[#allocation7 + $0xe8] sm:$0xff]
        %v748 = vld [vmem:[#allocation7 + $0xf0] sm:$0xff]
        %v749 = vld [vmem:[#allocation7 + $0xf8] sm:$0xff]
        %v750 = vld [vmem:[#allocation7 + $0x100] sm:$0xff]
        %v751 = vld [vmem:[#allocation7 + $0x108] sm:$0xff]
        %v752 = vld [vmem:[#allocation7 + $0x110] sm:$0xff]
        %v753 = vld [vmem:[#allocation7 + $0x118] sm:$0xff]
        %v754 = vld [vmem:[#allocation7 + $0x120] sm:$0xff]
        %v755 = vld [vmem:[#allocation7 + $0x128] sm:$0xff]
        %v756 = vld [vmem:[#allocation7 + $0x130] sm:$0xff]
        %v757 = vld [vmem:[#allocation7 + $0x138] sm:$0xff]
        %v758 = vld [vmem:[#allocation7 + $0x140] sm:$0xff]
        %v759 = vld [vmem:[#allocation7 + $0x148] sm:$0xff]
        %v760 = vld [vmem:[#allocation7 + $0x150] sm:$0xff]
        %v761 = vld [vmem:[#allocation7 + $0x158] sm:$0xff]
        %v762 = vld [vmem:[#allocation7 + $0x160] sm:$0xff]
        %v763 = vld [vmem:[#allocation7 + $0x168] sm:$0xff]
        %v764 = vld [vmem:[#allocation7 + $0x170] sm:$0xff]
        %v765 = vld [vmem:[#allocation7 + $0x178] sm:$0xff]
        %v766 = vld [vmem:[#allocation7 + $0x180] sm:$0xff]
        %v767 = vld [vmem:[#allocation7 + $0x188] sm:$0xff]
        %v768 = vld [vmem:[#allocation7 + $0x190] sm:$0xff]
        %v769 = vld [vmem:[#allocation7 + $0x198] sm:$0xff]
        %v770 = vld [vmem:[#allocation7 + $0x1a0] sm:$0xff]
        %v771 = vld [vmem:[#allocation7 + $0x1a8] sm:$0xff]
        %v772 = vld [vmem:[#allocation7 + $0x1b0] sm:$0xff]
        %v773 = vld [vmem:[#allocation7 + $0x1b8] sm:$0xff]
        %v774 = vld [vmem:[#allocation7 + $0x1c0] sm:$0xff]
        %v775 = vld [vmem:[#allocation7 + $0x1c8] sm:$0xff]
        %v776 = vld [vmem:[#allocation7 + $0x1d0] sm:$0xff]
        %v777 = vld [vmem:[#allocation7 + $0x1d8] sm:$0xff]
        %v778 = vld [vmem:[#allocation7 + $0x1e0] sm:$0xff]
        %v779 = vld [vmem:[#allocation7 + $0x1e8] sm:$0xff]
        %v780 = vld [vmem:[#allocation7 + $0x1f0] sm:$0xff]
        %v781 = vld [vmem:[#allocation7 + $0x1f8] sm:$0xff]
        %v782 = vld [vmem:[#allocation8] sm:$0xff]
        %v783 = vld [vmem:[#allocation8 + $0x8] sm:$0xff]
        %v784 = vld [vmem:[#allocation8 + $0x10] sm:$0xff]
        %v785 = vld [vmem:[#allocation8 + $0x18] sm:$0xff]
        %v786 = vld [vmem:[#allocation8 + $0x20] sm:$0xff]
        %v787 = vld [vmem:[#allocation8 + $0x28] sm:$0xff]
        %v788 = vld [vmem:[#allocation8 + $0x30] sm:$0xff]
        %v789 = vld [vmem:[#allocation8 + $0x38] sm:$0xff]
        %v790 = vld [vmem:[#allocation8 + $0x40] sm:$0xff]
        %v791 = vld [vmem:[#allocation8 + $0x48] sm:$0xff]
        %v792 = vld [vmem:[#allocation8 + $0x50] sm:$0xff]
        %v793 = vld [vmem:[#allocation8 + $0x58] sm:$0xff]
        %v794 = vld [vmem:[#allocation8 + $0x60] sm:$0xff]
        %v795 = vld [vmem:[#allocation8 + $0x68] sm:$0xff]
        %v796 = vld [vmem:[#allocation8 + $0x70] sm:$0xff]
        %v797 = vld [vmem:[#allocation8 + $0x78] sm:$0xff]
        %v798 = vld [vmem:[#allocation8 + $0x80] sm:$0xff]
        %v799 = vld [vmem:[#allocation8 + $0x88] sm:$0xff]
        %v800 = vld [vmem:[#allocation8 + $0x90] sm:$0xff]
        %v801 = vld [vmem:[#allocation8 + $0x98] sm:$0xff]
        %v802 = vld [vmem:[#allocation8 + $0xa0] sm:$0xff]
        %v803 = vld [vmem:[#allocation8 + $0xa8] sm:$0xff]
        %v804 = vld [vmem:[#allocation8 + $0xb0] sm:$0xff]
        %v805 = vld [vmem:[#allocation8 + $0xb8] sm:$0xff]
        %v806 = vld [vmem:[#allocation8 + $0xc0] sm:$0xff]
        %v807 = vld [vmem:[#allocation8 + $0xc8] sm:$0xff]
        %v808 = vld [vmem:[#allocation8 + $0xd0] sm:$0xff]
        %v809 = vld [vmem:[#allocation8 + $0xd8] sm:$0xff]
        %v810 = vld [vmem:[#allocation8 + $0xe0] sm:$0xff]
        %v811 = vld [vmem:[#allocation8 + $0xe8] sm:$0xff]
        %v812 = vld [vmem:[#allocation8 + $0xf0] sm:$0xff]
        %v813 = vld [vmem:[#allocation8 + $0xf8] sm:$0xff]
        %v814 = vld [vmem:[#allocation8 + $0x100] sm:$0xff]
        %v815 = vld [vmem:[#allocation8 + $0x108] sm:$0xff]
        %v816 = vld [vmem:[#allocation8 + $0x110] sm:$0xff]
        %v817 = vld [vmem:[#allocation8 + $0x118] sm:$0xff]
        %v818 = vld [vmem:[#allocation8 + $0x120] sm:$0xff]
        %v819 = vld [vmem:[#allocation8 + $0x128] sm:$0xff]
        %v820 = vld [vmem:[#allocation8 + $0x130] sm:$0xff]
        %v821 = vld [vmem:[#allocation8 + $0x138] sm:$0xff]
        %v822 = vld [vmem:[#allocation8 + $0x140] sm:$0xff]
        %v823 = vld [vmem:[#allocation8 + $0x148] sm:$0xff]
        %v824 = vld [vmem:[#allocation8 + $0x150] sm:$0xff]
        %v825 = vld [vmem:[#allocation8 + $0x158] sm:$0xff]
        %v826 = vld [vmem:[#allocation8 + $0x160] sm:$0xff]
        %v827 = vld [vmem:[#allocation8 + $0x168] sm:$0xff]
        %v828 = vld [vmem:[#allocation8 + $0x170] sm:$0xff]
        %v829 = vld [vmem:[#allocation8 + $0x178] sm:$0xff]
        %v830 = vld [vmem:[#allocation8 + $0x180] sm:$0xff]
        %v831 = vld [vmem:[#allocation8 + $0x188] sm:$0xff]
        %v832 = vld [vmem:[#allocation8 + $0x190] sm:$0xff]
        %v833 = vld [vmem:[#allocation8 + $0x198] sm:$0xff]
        %v834 = vld [vmem:[#allocation8 + $0x1a0] sm:$0xff]
        %v835 = vld [vmem:[#allocation8 + $0x1a8] sm:$0xff]
        %v836 = vld [vmem:[#allocation8 + $0x1b0] sm:$0xff]
        %v837 = vld [vmem:[#allocation8 + $0x1b8] sm:$0xff]
        %v838 = vld [vmem:[#allocation8 + $0x1c0] sm:$0xff]
        %v839 = vld [vmem:[#allocation8 + $0x1c8] sm:$0xff]
        %v840 = vld [vmem:[#allocation8 + $0x1d0] sm:$0xff]
        %v841 = vld [vmem:[#allocation8 + $0x1d8] sm:$0xff]
        %v842 = vld [vmem:[#allocation8 + $0x1e0] sm:$0xff]
        %v843 = vld [vmem:[#allocation8 + $0x1e8] sm:$0xff]
        %v844 = vld [vmem:[#allocation8 + $0x1f0] sm:$0xff]
        %v845 = vld [vmem:[#allocation8 + $0x1f8] sm:$0xff]
        %846 = vmatprep.subr.mxu0 %v719
        %847 = vmatpush1.msra.mxu0 %v718
        %848 = vmatprep.subr.mxu0 %v721
        %849 = vmatpush1.msra.mxu0 %v720
        %850 = vmatprep.subr.mxu0 %v723
        %851 = vmatpush1.msra.mxu0 %v722
        %852 = vmatprep.subr.mxu0 %v725
        %853 = vmatpush1.msra.mxu0 %v724
        %854 = vmatprep.subr.mxu0 %v727
        %855 = vmatpush1.msra.mxu0 %v726
        %856 = vmatprep.subr.mxu0 %v729
        %857 = vmatpush1.msra.mxu0 %v728
        %858 = vmatprep.subr.mxu0 %v731
        %859 = vmatpush1.msra.mxu0 %v730
        %860 = vmatprep.subr.mxu0 %v733
        %861 = vmatpush1.msra.mxu0 %v732
        %862 = vmatprep.subr.mxu0 %v735
        %863 = vmatpush1.msra.mxu0 %v734
        %864 = vmatprep.subr.mxu0 %v737
        %865 = vmatpush1.msra.mxu0 %v736
        %866 = vmatprep.subr.mxu0 %v739
        %867 = vmatpush1.msra.mxu0 %v738
        %868 = vmatprep.subr.mxu0 %v741
        %869 = vmatpush1.msra.mxu0 %v740
        %870 = vmatprep.subr.mxu0 %v743
        %871 = vmatpush1.msra.mxu0 %v742
        %872 = vmatprep.subr.mxu0 %v745
        %873 = vmatpush1.msra.mxu0 %v744
        %874 = vmatprep.subr.mxu0 %v747
        %875 = vmatpush1.msra.mxu0 %v746
        %876 = vmatprep.subr.mxu0 %v749
        %877 = vmatpush1.msra.mxu0 %v748
        %878 = vmatprep.subr.mxu0 %v751
        %879 = vmatpush1.msra.mxu0 %v750
        %880 = vmatprep.subr.mxu0 %v753
        %881 = vmatpush1.msra.mxu0 %v752
        %882 = vmatprep.subr.mxu0 %v755
        %883 = vmatpush1.msra.mxu0 %v754
        %884 = vmatprep.subr.mxu0 %v757
        %885 = vmatpush1.msra.mxu0 %v756
        %886 = vmatprep.subr.mxu0 %v759
        %887 = vmatpush1.msra.mxu0 %v758
        %888 = vmatprep.subr.mxu0 %v761
        %889 = vmatpush1.msra.mxu0 %v760
        %890 = vmatprep.subr.mxu0 %v763
        %891 = vmatpush1.msra.mxu0 %v762
        %892 = vmatprep.subr.mxu0 %v765
        %893 = vmatpush1.msra.mxu0 %v764
        %894 = vmatprep.subr.mxu0 %v767
        %895 = vmatpush1.msra.mxu0 %v766
        %896 = vmatprep.subr.mxu0 %v769
        %897 = vmatpush1.msra.mxu0 %v768
        %898 = vmatprep.subr.mxu0 %v771
        %899 = vmatpush1.msra.mxu0 %v770
        %900 = vmatprep.subr.mxu0 %v773
        %901 = vmatpush1.msra.mxu0 %v772
        %902 = vmatprep.subr.mxu0 %v775
        %903 = vmatpush1.msra.mxu0 %v774
        %904 = vmatprep.subr.mxu0 %v777
        %905 = vmatpush1.msra.mxu0 %v776
        %906 = vmatprep.subr.mxu0 %v779
        %907 = vmatpush1.msra.mxu0 %v778
        %908 = vmatprep.subr.mxu0 %v781
        %909 = vmatpush1.msra.mxu0 %v780
        %910 = vmatprep.mubr.f32.mxu0 %v715
        %911 = vmatmul.mubr.f32.gmra.mrb[0].mxu0 %v714
        %v912 = vpop.f32.mrb[0].mxu0
        %v913 = vadd.f32 0.0, %v912
        %v914 = vpop.f32.mrb[0].mxu0
        %v915 = vadd.f32 0.0, %v914
        %916 = vmatprep.mubr.f32.mxu0 %v717
        %917 = vmatmul.mubr.f32.gmra.mrb[0].mxu0 %v716
        %v918 = vpop.f32.mrb[0].mxu0
        %v919 = vadd.f32 0.0, %v918
        %v920 = vpop.f32.mrb[0].mxu0
        %v921 = vadd.f32 0.0, %v920
        %922 = vdwg.mxu0
        %923 = vmatprep.subr.mxu0 %v346
        %924 = vmatpush1.msra.mxu0 %v345
        %925 = vmatprep.subr.mxu0 %v348
        %926 = vmatpush1.msra.mxu0 %v347
        %927 = vmatprep.subr.mxu0 %v350
        %928 = vmatpush1.msra.mxu0 %v349
        %929 = vmatprep.subr.mxu0 %v352
        %930 = vmatpush1.msra.mxu0 %v351
        %931 = vmatprep.subr.mxu0 %v354
        %932 = vmatpush1.msra.mxu0 %v353
        %933 = vmatprep.subr.mxu0 %v356
        %934 = vmatpush1.msra.mxu0 %v355
        %935 = vmatprep.subr.mxu0 %v358
        %936 = vmatpush1.msra.mxu0 %v357
        %937 = vmatprep.subr.mxu0 %v360
        %938 = vmatpush1.msra.mxu0 %v359
        %939 = vmatprep.subr.mxu0 %v362
        %940 = vmatpush1.msra.mxu0 %v361
        %941 = vmatprep.subr.mxu0 %v364
        %942 = vmatpush1.msra.mxu0 %v363
        %943 = vmatprep.subr.mxu0 %v366
        %944 = vmatpush1.msra.mxu0 %v365
        %945 = vmatprep.subr.mxu0 %v368
        %946 = vmatpush1.msra.mxu0 %v367
        %947 = vmatprep.subr.mxu0 %v370
        %948 = vmatpush1.msra.mxu0 %v369
        %949 = vmatprep.subr.mxu0 %v372
        %950 = vmatpush1.msra.mxu0 %v371
        %951 = vmatprep.subr.mxu0 %v374
        %952 = vmatpush1.msra.mxu0 %v373
        %953 = vmatprep.subr.mxu0 %v376
        %954 = vmatpush1.msra.mxu0 %v375
        %955 = vmatprep.subr.mxu0 %v378
        %956 = vmatpush1.msra.mxu0 %v377
        %957 = vmatprep.subr.mxu0 %v380
        %958 = vmatpush1.msra.mxu0 %v379
        %959 = vmatprep.subr.mxu0 %v382
        %960 = vmatpush1.msra.mxu0 %v381
        %961 = vmatprep.subr.mxu0 %v384
        %962 = vmatpush1.msra.mxu0 %v383
        %963 = vmatprep.subr.mxu0 %v386
        %964 = vmatpush1.msra.mxu0 %v385
        %965 = vmatprep.subr.mxu0 %v388
        %966 = vmatpush1.msra.mxu0 %v387
        %967 = vmatprep.subr.mxu0 %v390
        %968 = vmatpush1.msra.mxu0 %v389
        %969 = vmatprep.subr.mxu0 %v392
        %970 = vmatpush1.msra.mxu0 %v391
        %971 = vmatprep.subr.mxu0 %v394
        %972 = vmatpush1.msra.mxu0 %v393
        %973 = vmatprep.subr.mxu0 %v396
        %974 = vmatpush1.msra.mxu0 %v395
        %975 = vmatprep.subr.mxu0 %v398
        %976 = vmatpush1.msra.mxu0 %v397
        %977 = vmatprep.subr.mxu0 %v400
        %978 = vmatpush1.msra.mxu0 %v399
        %979 = vmatprep.subr.mxu0 %v402
        %980 = vmatpush1.msra.mxu0 %v401
        %981 = vmatprep.subr.mxu0 %v404
        %982 = vmatpush1.msra.mxu0 %v403
        %983 = vmatprep.subr.mxu0 %v406
        %984 = vmatpush1.msra.mxu0 %v405
        %985 = vmatprep.subr.mxu0 %v408
        %986 = vmatpush1.msra.mxu0 %v407
        %987 = vmatprep.mubr.f32.mxu0 %v915
        %988 = vmatmul.mubr.f32.gmra.mrb[0].mxu0 %v913
        %v989 = vpop.f32.mrb[0].mxu0
        %v990 = vadd.f32 0.0, %v989
        %v991 = vpop.f32.mrb[0].mxu0
        %v992 = vadd.f32 0.0, %v991
        %993 = vmatprep.mubr.f32.mxu0 %v921
        %994 = vmatmul.mubr.f32.gmra.mrb[0].mxu0 %v919
        %v995 = vpop.f32.mrb[0].mxu0
        %v996 = vadd.f32 0.0, %v995
        %v997 = vpop.f32.mrb[0].mxu0
        %v998 = vadd.f32 0.0, %v997
        %999 = vdwg.mxu0
        %v1000 = vmul.f32 %v913, %v913
        %v1001 = vmul.f32 %v915, %v915
        %v1002 = vmul.f32 %v919, %v919
        %v1003 = vmul.f32 %v921, %v921
        %1004 = vmatprep.subr.mxu0 %v346
        %1005 = vmatpush1.msra.mxu0 %v345
        %1006 = vmatprep.subr.mxu0 %v348
        %1007 = vmatpush1.msra.mxu0 %v347
        %1008 = vmatprep.subr.mxu0 %v350
        %1009 = vmatpush1.msra.mxu0 %v349
        %1010 = vmatprep.subr.mxu0 %v352
        %1011 = vmatpush1.msra.mxu0 %v351
        %1012 = vmatprep.subr.mxu0 %v354
        %1013 = vmatpush1.msra.mxu0 %v353
        %1014 = vmatprep.subr.mxu0 %v356
        %1015 = vmatpush1.msra.mxu0 %v355
        %1016 = vmatprep.subr.mxu0 %v358
        %1017 = vmatpush1.msra.mxu0 %v357
        %1018 = vmatprep.subr.mxu0 %v360
        %1019 = vmatpush1.msra.mxu0 %v359
        %1020 = vmatprep.subr.mxu0 %v362
        %1021 = vmatpush1.msra.mxu0 %v361
        %1022 = vmatprep.subr.mxu0 %v364
        %1023 = vmatpush1.msra.mxu0 %v363
        %1024 = vmatprep.subr.mxu0 %v366
        %1025 = vmatpush1.msra.mxu0 %v365
        %1026 = vmatprep.subr.mxu0 %v368
        %1027 = vmatpush1.msra.mxu0 %v367
        %1028 = vmatprep.subr.mxu0 %v370
        %1029 = vmatpush1.msra.mxu0 %v369
        %1030 = vmatprep.subr.mxu0 %v372
        %1031 = vmatpush1.msra.mxu0 %v371
        %1032 = vmatprep.subr.mxu0 %v374
        %1033 = vmatpush1.msra.mxu0 %v373
        %1034 = vmatprep.subr.mxu0 %v376
        %1035 = vmatpush1.msra.mxu0 %v375
        %1036 = vmatprep.subr.mxu0 %v378
        %1037 = vmatpush1.msra.mxu0 %v377
        %1038 = vmatprep.subr.mxu0 %v380
        %1039 = vmatpush1.msra.mxu0 %v379
        %1040 = vmatprep.subr.mxu0 %v382
        %1041 = vmatpush1.msra.mxu0 %v381
        %1042 = vmatprep.subr.mxu0 %v384
        %1043 = vmatpush1.msra.mxu0 %v383
        %1044 = vmatprep.subr.mxu0 %v386
        %1045 = vmatpush1.msra.mxu0 %v385
        %1046 = vmatprep.subr.mxu0 %v388
        %1047 = vmatpush1.msra.mxu0 %v387
        %1048 = vmatprep.subr.mxu0 %v390
        %1049 = vmatpush1.msra.mxu0 %v389
        %1050 = vmatprep.subr.mxu0 %v392
        %1051 = vmatpush1.msra.mxu0 %v391
        %1052 = vmatprep.subr.mxu0 %v394
        %1053 = vmatpush1.msra.mxu0 %v393
        %1054 = vmatprep.subr.mxu0 %v396
        %1055 = vmatpush1.msra.mxu0 %v395
        %1056 = vmatprep.subr.mxu0 %v398
        %1057 = vmatpush1.msra.mxu0 %v397
        %1058 = vmatprep.subr.mxu0 %v400
        %1059 = vmatpush1.msra.mxu0 %v399
        %1060 = vmatprep.subr.mxu0 %v402
        %1061 = vmatpush1.msra.mxu0 %v401
        %1062 = vmatprep.subr.mxu0 %v404
        %1063 = vmatpush1.msra.mxu0 %v403
        %1064 = vmatprep.subr.mxu0 %v406
        %1065 = vmatpush1.msra.mxu0 %v405
        %1066 = vmatprep.subr.mxu0 %v408
        %1067 = vmatpush1.msra.mxu0 %v407
        %1068 = vmatprep.mubr.f32.mxu0 %v1001
        %1069 = vmatmul.mubr.f32.gmra.mrb[0].mxu0 %v1000
        %v1070 = vpop.f32.mrb[0].mxu0
        %v1071 = vadd.f32 0.0, %v1070
        %v1072 = vpop.f32.mrb[0].mxu0
        %v1073 = vadd.f32 0.0, %v1072
        %1074 = vmatprep.mubr.f32.mxu0 %v1003
        %1075 = vmatmul.mubr.f32.gmra.mrb[0].mxu0 %v1002
        %v1076 = vpop.f32.mrb[0].mxu0
        %v1077 = vadd.f32 0.0, %v1076
        %v1078 = vpop.f32.mrb[0].mxu0
        %v1079 = vadd.f32 0.0, %v1078
        %1080 = vdwg.mxu0
        %v1081 = vmul.f32 %v990, 0.03125
        %v1082 = vmul.f32 %v992, 0.03125
        %v1083 = vmul.f32 %v996, 0.03125
        %v1084 = vmul.f32 %v998, 0.03125
        %v1085 = vmul.f32 %v1071, 0.03125
        %v1086 = vmul.f32 %v1073, 0.03125
        %v1087 = vmul.f32 %v1077, 0.03125
        %v1088 = vmul.f32 %v1079, 0.03125
        %v1089 = vmul.f32 %v1081, %v1081
        %v1090 = vmul.f32 %v1082, %v1082
        %v1091 = vmul.f32 %v1083, %v1083
        %v1092 = vmul.f32 %v1084, %v1084
        %v1093 = vsub.f32 %v1085, %v1089
        %v1094 = vsub.f32 %v1086, %v1090
        %v1095 = vsub.f32 %v1087, %v1091
        %v1096 = vsub.f32 %v1088, %v1092
        %v1097 = vmax.f32 %v1093, 0.0
        %v1098 = vmax.f32 %v1094, 0.0
        %v1099 = vmax.f32 %v1095, 0.0
        %v1100 = vmax.f32 %v1096, 0.0
        %v1101 = vsub.f32 %v913, %v1081
        %v1102 = vsub.f32 %v915, %v1082
        %v1103 = vsub.f32 %v919, %v1083
        %v1104 = vsub.f32 %v921, %v1084
        %v1105 = vadd.f32 %v1097, 1e-05
        %v1106 = vadd.f32 %v1098, 1e-05
        %v1107 = vadd.f32 %v1099, 1e-05
        %v1108 = vadd.f32 %v1100, 1e-05
        %v1109 = vrsqrt.pop %v1105
        %v1110 = vrsqrt.pop %v1106
        %v1111 = vrsqrt.pop %v1107
        %v1112 = vrsqrt.pop %v1108
        %v1113 = vmul.f32 %v1101, %v1109
        %v1114 = vmul.f32 %v1102, %v1110
        %v1115 = vmul.f32 %v1103, %v1111
        %v1116 = vmul.f32 %v1104, %v1112
        %v1117 = vtanh.pop %v1113
        %v1118 = vtanh.pop %v1114
        %v1119 = vtanh.pop %v1115
        %v1120 = vtanh.pop %v1116
        %1121 = vmatprep.subr.mxu0 %v783
        %1122 = vmatpush1.msra.mxu0 %v782
        %1123 = vmatprep.subr.mxu0 %v785
        %1124 = vmatpush1.msra.mxu0 %v784
        %1125 = vmatprep.subr.mxu0 %v787
        %1126 = vmatpush1.msra.mxu0 %v786
        %1127 = vmatprep.subr.mxu0 %v789
        %1128 = vmatpush1.msra.mxu0 %v788
        %1129 = vmatprep.subr.mxu0 %v791
        %1130 = vmatpush1.msra.mxu0 %v790
        %1131 = vmatprep.subr.mxu0 %v793
        %1132 = vmatpush1.msra.mxu0 %v792
        %1133 = vmatprep.subr.mxu0 %v795
        %1134 = vmatpush1.msra.mxu0 %v794
        %1135 = vmatprep.subr.mxu0 %v797
        %1136 = vmatpush1.msra.mxu0 %v796
        %1137 = vmatprep.subr.mxu0 %v799
        %1138 = vmatpush1.msra.mxu0 %v798
        %1139 = vmatprep.subr.mxu0 %v801
        %1140 = vmatpush1.msra.mxu0 %v800
        %1141 = vmatprep.subr.mxu0 %v803
        %1142 = vmatpush1.msra.mxu0 %v802
        %1143 = vmatprep.subr.mxu0 %v805
        %1144 = vmatpush1.msra.mxu0 %v804
        %1145 = vmatprep.subr.mxu0 %v807
        %1146 = vmatpush1.msra.mxu0 %v806
        %1147 = vmatprep.subr.mxu0 %v809
        %1148 = vmatpush1.msra.mxu0 %v808
        %1149 = vmatprep.subr.mxu0 %v811
        %1150 = vmatpush1.msra.mxu0 %v810
        %1151 = vmatprep.subr.mxu0 %v813
        %1152 = vmatpush1.msra.mxu0 %v812
        %1153 = vmatprep.subr.mxu0 %v815
        %1154 = vmatpush1.msra.mxu0 %v814
        %1155 = vmatprep.subr.mxu0 %v817
        %1156 = vmatpush1.msra.mxu0 %v816
        %1157 = vmatprep.subr.mxu0 %v819
        %1158 = vmatpush1.msra.mxu0 %v818
        %1159 = vmatprep.subr.mxu0 %v821
        %1160 = vmatpush1.msra.mxu0 %v820
        %1161 = vmatprep.subr.mxu0 %v823
        %1162 = vmatpush1.msra.mxu0 %v822
        %1163 = vmatprep.subr.mxu0 %v825
        %1164 = vmatpush1.msra.mxu0 %v824
        %1165 = vmatprep.subr.mxu0 %v827
        %1166 = vmatpush1.msra.mxu0 %v826
        %1167 = vmatprep.subr.mxu0 %v829
        %1168 = vmatpush1.msra.mxu0 %v828
        %1169 = vmatprep.subr.mxu0 %v831
        %1170 = vmatpush1.msra.mxu0 %v830
        %1171 = vmatprep.subr.mxu0 %v833
        %1172 = vmatpush1.msra.mxu0 %v832
        %1173 = vmatprep.subr.mxu0 %v835
        %1174 = vmatpush1.msra.mxu0 %v834
        %1175 = vmatprep.subr.mxu0 %v837
        %1176 = vmatpush1.msra.mxu0 %v836
        %1177 = vmatprep.subr.mxu0 %v839
        %1178 = vmatpush1.msra.mxu0 %v838
        %1179 = vmatprep.subr.mxu0 %v841
        %1180 = vmatpush1.msra.mxu0 %v840
        %1181 = vmatprep.subr.mxu0 %v843
        %1182 = vmatpush1.msra.mxu0 %v842
        %1183 = vmatprep.subr.mxu0 %v845
        %1184 = vmatpush1.msra.mxu0 %v844
        %1185 = vmatprep.mubr.f32.mxu0 %v1118
        %1186 = vmatmul.mubr.f32.gmra.mrb[0].mxu0 %v1117
        %v1187 = vpop.f32.mrb[0].mxu0
        %v1188 = vadd.f32 0.0, %v1187
        %v1189 = vpop.f32.mrb[0].mxu0
        %v1190 = vadd.f32 0.0, %v1189
        %1191 = vmatprep.mubr.f32.mxu0 %v1120
        %1192 = vmatmul.mubr.f32.gmra.mrb[0].mxu0 %v1119
        %v1193 = vpop.f32.mrb[0].mxu0
        %v1194 = vadd.f32 0.0, %v1193
        %v1195 = vpop.f32.mrb[0].mxu0
        %v1196 = vadd.f32 0.0, %v1195
        %1197 = vdwg.mxu0
        %1198 = vmatprep.subr.mxu0 %v346
        %1199 = vmatpush1.msra.mxu0 %v345
        %1200 = vmatprep.subr.mxu0 %v348
        %1201 = vmatpush1.msra.mxu0 %v347
        %1202 = vmatprep.subr.mxu0 %v350
        %1203 = vmatpush1.msra.mxu0 %v349
        %1204 = vmatprep.subr.mxu0 %v352
        %1205 = vmatpush1.msra.mxu0 %v351
        %1206 = vmatprep.subr.mxu0 %v354
        %1207 = vmatpush1.msra.mxu0 %v353
        %1208 = vmatprep.subr.mxu0 %v356
        %1209 = vmatpush1.msra.mxu0 %v355
        %1210 = vmatprep.subr.mxu0 %v358
        %1211 = vmatpush1.msra.mxu0 %v357
        %1212 = vmatprep.subr.mxu0 %v360
        %1213 = vmatpush1.msra.mxu0 %v359
        %1214 = vmatprep.subr.mxu0 %v362
        %1215 = vmatpush1.msra.mxu0 %v361
        %1216 = vmatprep.subr.mxu0 %v364
        %1217 = vmatpush1.msra.mxu0 %v363
        %1218 = vmatprep.subr.mxu0 %v366
        %1219 = vmatpush1.msra.mxu0 %v365
        %1220 = vmatprep.subr.mxu0 %v368
        %1221 = vmatpush1.msra.mxu0 %v367
        %1222 = vmatprep.subr.mxu0 %v370
        %1223 = vmatpush1.msra.mxu0 %v369
        %1224 = vmatprep.subr.mxu0 %v372
        %1225 = vmatpush1.msra.mxu0 %v371
        %1226 = vmatprep.subr.mxu0 %v374
        %1227 = vmatpush1.msra.mxu0 %v373
        %1228 = vmatprep.subr.mxu0 %v376
        %1229 = vmatpush1.msra.mxu0 %v375
        %1230 = vmatprep.subr.mxu0 %v378
        %1231 = vmatpush1.msra.mxu0 %v377
        %1232 = vmatprep.subr.mxu0 %v380
        %1233 = vmatpush1.msra.mxu0 %v379
        %1234 = vmatprep.subr.mxu0 %v382
        %1235 = vmatpush1.msra.mxu0 %v381
        %1236 = vmatprep.subr.mxu0 %v384
        %1237 = vmatpush1.msra.mxu0 %v383
        %1238 = vmatprep.subr.mxu0 %v386
        %1239 = vmatpush1.msra.mxu0 %v385
        %1240 = vmatprep.subr.mxu0 %v388
        %1241 = vmatpush1.msra.mxu0 %v387
        %1242 = vmatprep.subr.mxu0 %v390
        %1243 = vmatpush1.msra.mxu0 %v389
        %1244 = vmatprep.subr.mxu0 %v392
        %1245 = vmatpush1.msra.mxu0 %v391
        %1246 = vmatprep.subr.mxu0 %v394
        %1247 = vmatpush1.msra.mxu0 %v393
        %1248 = vmatprep.subr.mxu0 %v396
        %1249 = vmatpush1.msra.mxu0 %v395
        %1250 = vmatprep.subr.mxu0 %v398
        %1251 = vmatpush1.msra.mxu0 %v397
        %1252 = vmatprep.subr.mxu0 %v400
        %1253 = vmatpush1.msra.mxu0 %v399
        %1254 = vmatprep.subr.mxu0 %v402
        %1255 = vmatpush1.msra.mxu0 %v401
        %1256 = vmatprep.subr.mxu0 %v404
        %1257 = vmatpush1.msra.mxu0 %v403
        %1258 = vmatprep.subr.mxu0 %v406
        %1259 = vmatpush1.msra.mxu0 %v405
        %1260 = vmatprep.subr.mxu0 %v408
        %1261 = vmatpush1.msra.mxu0 %v407
        %1262 = vmatprep.mubr.f32.mxu0 %v1190
        %1263 = vmatmul.mubr.f32.gmra.mrb[0].mxu0 %v1188
        %v1264 = vpop.f32.mrb[0].mxu0
        %v1265 = vadd.f32 0.0, %v1264
        %v1266 = vpop.f32.mrb[0].mxu0
        %v1267 = vadd.f32 0.0, %v1266
        %1268 = vmatprep.mubr.f32.mxu0 %v1196
        %1269 = vmatmul.mubr.f32.gmra.mrb[0].mxu0 %v1194
        %v1270 = vpop.f32.mrb[0].mxu0
        %v1271 = vadd.f32 0.0, %v1270
        %v1272 = vpop.f32.mrb[0].mxu0
        %v1273 = vadd.f32 0.0, %v1272
        %1274 = vdwg.mxu0
        %v1275 = vmul.f32 %v1188, %v1188
        %v1276 = vmul.f32 %v1190, %v1190
        %v1277 = vmul.f32 %v1194, %v1194
        %v1278 = vmul.f32 %v1196, %v1196
        %1279 = vmatprep.subr.mxu0 %v346
        %1280 = vmatpush1.msra.mxu0 %v345
        %1281 = vmatprep.subr.mxu0 %v348
        %1282 = vmatpush1.msra.mxu0 %v347
        %1283 = vmatprep.subr.mxu0 %v350
        %1284 = vmatpush1.msra.mxu0 %v349
        %1285 = vmatprep.subr.mxu0 %v352
        %1286 = vmatpush1.msra.mxu0 %v351
        %1287 = vmatprep.subr.mxu0 %v354
        %1288 = vmatpush1.msra.mxu0 %v353
        %1289 = vmatprep.subr.mxu0 %v356
        %1290 = vmatpush1.msra.mxu0 %v355
        %1291 = vmatprep.subr.mxu0 %v358
        %1292 = vmatpush1.msra.mxu0 %v357
        %1293 = vmatprep.subr.mxu0 %v360
        %1294 = vmatpush1.msra.mxu0 %v359
        %1295 = vmatprep.subr.mxu0 %v362
        %1296 = vmatpush1.msra.mxu0 %v361
        %1297 = vmatprep.subr.mxu0 %v364
        %1298 = vmatpush1.msra.mxu0 %v363
        %1299 = vmatprep.subr.mxu0 %v366
        %1300 = vmatpush1.msra.mxu0 %v365
        %1301 = vmatprep.subr.mxu0 %v368
        %1302 = vmatpush1.msra.mxu0 %v367
        %1303 = vmatprep.subr.mxu0 %v370
        %1304 = vmatpush1.msra.mxu0 %v369
        %1305 = vmatprep.subr.mxu0 %v372
        %1306 = vmatpush1.msra.mxu0 %v371
        %1307 = vmatprep.subr.mxu0 %v374
        %1308 = vmatpush1.msra.mxu0 %v373
        %1309 = vmatprep.subr.mxu0 %v376
        %1310 = vmatpush1.msra.mxu0 %v375
        %1311 = vmatprep.subr.mxu0 %v378
        %1312 = vmatpush1.msra.mxu0 %v377
        %1313 = vmatprep.subr.mxu0 %v380
        %1314 = vmatpush1.msra.mxu0 %v379
        %1315 = vmatprep.subr.mxu0 %v382
        %1316 = vmatpush1.msra.mxu0 %v381
        %1317 = vmatprep.subr.mxu0 %v384
        %1318 = vmatpush1.msra.mxu0 %v383
        %1319 = vmatprep.subr.mxu0 %v386
        %1320 = vmatpush1.msra.mxu0 %v385
        %1321 = vmatprep.subr.mxu0 %v388
        %1322 = vmatpush1.msra.mxu0 %v387
        %1323 = vmatprep.subr.mxu0 %v390
        %1324 = vmatpush1.msra.mxu0 %v389
        %1325 = vmatprep.subr.mxu0 %v392
        %1326 = vmatpush1.msra.mxu0 %v391
        %1327 = vmatprep.subr.mxu0 %v394
        %1328 = vmatpush1.msra.mxu0 %v393
        %1329 = vmatprep.subr.mxu0 %v396
        %1330 = vmatpush1.msra.mxu0 %v395
        %1331 = vmatprep.subr.mxu0 %v398
        %1332 = vmatpush1.msra.mxu0 %v397
        %1333 = vmatprep.subr.mxu0 %v400
        %1334 = vmatpush1.msra.mxu0 %v399
        %1335 = vmatprep.subr.mxu0 %v402
        %1336 = vmatpush1.msra.mxu0 %v401
        %1337 = vmatprep.subr.mxu0 %v404
        %1338 = vmatpush1.msra.mxu0 %v403
        %1339 = vmatprep.subr.mxu0 %v406
        %1340 = vmatpush1.msra.mxu0 %v405
        %1341 = vmatprep.subr.mxu0 %v408
        %1342 = vmatpush1.msra.mxu0 %v407
        %1343 = vmatprep.mubr.f32.mxu0 %v1276
        %1344 = vmatmul.mubr.f32.gmra.mrb[0].mxu0 %v1275
        %v1345 = vpop.f32.mrb[0].mxu0
        %v1346 = vadd.f32 0.0, %v1345
        %v1347 = vpop.f32.mrb[0].mxu0
        %v1348 = vadd.f32 0.0, %v1347
        %1349 = vmatprep.mubr.f32.mxu0 %v1278
        %1350 = vmatmul.mubr.f32.gmra.mrb[0].mxu0 %v1277
        %v1351 = vpop.f32.mrb[0].mxu0
        %v1352 = vadd.f32 0.0, %v1351
        %v1353 = vpop.f32.mrb[0].mxu0
        %v1354 = vadd.f32 0.0, %v1353
        %1355 = vdwg.mxu0
        %v1356 = vmul.f32 %v1265, 0.03125
        %v1357 = vmul.f32 %v1267, 0.03125
        %v1358 = vmul.f32 %v1271, 0.03125
        %v1359 = vmul.f32 %v1273, 0.03125
        %v1360 = vmul.f32 %v1346, 0.03125
        %v1361 = vmul.f32 %v1348, 0.03125
        %v1362 = vmul.f32 %v1352, 0.03125
        %v1363 = vmul.f32 %v1354, 0.03125
        %v1364 = vmul.f32 %v1356, %v1356
        %v1365 = vmul.f32 %v1357, %v1357
        %v1366 = vmul.f32 %v1358, %v1358
        %v1367 = vmul.f32 %v1359, %v1359
        %v1368 = vsub.f32 %v1360, %v1364
        %v1369 = vsub.f32 %v1361, %v1365
        %v1370 = vsub.f32 %v1362, %v1366
        %v1371 = vsub.f32 %v1363, %v1367
        %v1372 = vmax.f32 %v1368, 0.0
        %v1373 = vmax.f32 %v1369, 0.0
        %v1374 = vmax.f32 %v1370, 0.0
        %v1375 = vmax.f32 %v1371, 0.0
        %v1376 = vsub.f32 %v1188, %v1356
        %v1377 = vsub.f32 %v1190, %v1357
        %v1378 = vsub.f32 %v1194, %v1358
        %v1379 = vsub.f32 %v1196, %v1359
        %v1380 = vadd.f32 %v1372, 1e-05
        %v1381 = vadd.f32 %v1373, 1e-05
        %v1382 = vadd.f32 %v1374, 1e-05
        %v1383 = vadd.f32 %v1375, 1e-05
        %v1384 = vrsqrt.pop %v1380
        %v1385 = vrsqrt.pop %v1381
        %v1386 = vrsqrt.pop %v1382
        %v1387 = vrsqrt.pop %v1383
        %v1388 = vmul.f32 %v1376, %v1384
        %v1389 = vmul.f32 %v1377, %v1385
        %v1390 = vmul.f32 %v1378, %v1386
        %v1391 = vmul.f32 %v1379, %v1387
        %v1392 = vtanh.pop %v1388
        %v1393 = vtanh.pop %v1389
        %v1394 = vtanh.pop %v1390
        %v1395 = vtanh.pop %v1391
        %v1396 = vadd.f32 %v1392, %v714
        %v1397 = vadd.f32 %v1393, %v715
        %v1398 = vadd.f32 %v1394, %v716
        %v1399 = vadd.f32 %v1395, %v717
        %s1400 = scalar_lea.vmem [#allocation7], 512
        %v1401 = vld [vmem:[%s1400] sm:$0xff]
        %v1402 = vld [vmem:[%s1400 + $0x8] sm:$0xff]
        %v1403 = vld [vmem:[%s1400 + $0x10] sm:$0xff]
        %v1404 = vld [vmem:[%s1400 + $0x18] sm:$0xff]
        %v1405 = vld [vmem:[%s1400 + $0x20] sm:$0xff]
        %v1406 = vld [vmem:[%s1400 + $0x28] sm:$0xff]
        %v1407 = vld [vmem:[%s1400 + $0x30] sm:$0xff]
        %v1408 = vld [vmem:[%s1400 + $0x38] sm:$0xff]
        %v1409 = vld [vmem:[%s1400 + $0x40] sm:$0xff]
        %v1410 = vld [vmem:[%s1400 + $0x48] sm:$0xff]
        %v1411 = vld [vmem:[%s1400 + $0x50] sm:$0xff]
        %v1412 = vld [vmem:[%s1400 + $0x58] sm:$0xff]
        %v1413 = vld [vmem:[%s1400 + $0x60] sm:$0xff]
        %v1414 = vld [vmem:[%s1400 + $0x68] sm:$0xff]
        %v1415 = vld [vmem:[%s1400 + $0x70] sm:$0xff]
        %v1416 = vld [vmem:[%s1400 + $0x78] sm:$0xff]
        %v1417 = vld [vmem:[%s1400 + $0x80] sm:$0xff]
        %v1418 = vld [vmem:[%s1400 + $0x88] sm:$0xff]
        %v1419 = vld [vmem:[%s1400 + $0x90] sm:$0xff]
        %v1420 = vld [vmem:[%s1400 + $0x98] sm:$0xff]
        %v1421 = vld [vmem:[%s1400 + $0xa0] sm:$0xff]
        %v1422 = vld [vmem:[%s1400 + $0xa8] sm:$0xff]
        %v1423 = vld [vmem:[%s1400 + $0xb0] sm:$0xff]
        %v1424 = vld [vmem:[%s1400 + $0xb8] sm:$0xff]
        %v1425 = vld [vmem:[%s1400 + $0xc0] sm:$0xff]
        %v1426 = vld [vmem:[%s1400 + $0xc8] sm:$0xff]
        %v1427 = vld [vmem:[%s1400 + $0xd0] sm:$0xff]
        %v1428 = vld [vmem:[%s1400 + $0xd8] sm:$0xff]
        %v1429 = vld [vmem:[%s1400 + $0xe0] sm:$0xff]
        %v1430 = vld [vmem:[%s1400 + $0xe8] sm:$0xff]
        %v1431 = vld [vmem:[%s1400 + $0xf0] sm:$0xff]
        %v1432 = vld [vmem:[%s1400 + $0xf8] sm:$0xff]
        %v1433 = vld [vmem:[%s1400 + $0x100] sm:$0xff]
        %v1434 = vld [vmem:[%s1400 + $0x108] sm:$0xff]
        %v1435 = vld [vmem:[%s1400 + $0x110] sm:$0xff]
        %v1436 = vld [vmem:[%s1400 + $0x118] sm:$0xff]
        %v1437 = vld [vmem:[%s1400 + $0x120] sm:$0xff]
        %v1438 = vld [vmem:[%s1400 + $0x128] sm:$0xff]
        %v1439 = vld [vmem:[%s1400 + $0x130] sm:$0xff]
        %v1440 = vld [vmem:[%s1400 + $0x138] sm:$0xff]
        %v1441 = vld [vmem:[%s1400 + $0x140] sm:$0xff]
        %v1442 = vld [vmem:[%s1400 + $0x148] sm:$0xff]
        %v1443 = vld [vmem:[%s1400 + $0x150] sm:$0xff]
        %v1444 = vld [vmem:[%s1400 + $0x158] sm:$0xff]
        %v1445 = vld [vmem:[%s1400 + $0x160] sm:$0xff]
        %v1446 = vld [vmem:[%s1400 + $0x168] sm:$0xff]
        %v1447 = vld [vmem:[%s1400 + $0x170] sm:$0xff]
        %v1448 = vld [vmem:[%s1400 + $0x178] sm:$0xff]
        %v1449 = vld [vmem:[%s1400 + $0x180] sm:$0xff]
        %v1450 = vld [vmem:[%s1400 + $0x188] sm:$0xff]
        %v1451 = vld [vmem:[%s1400 + $0x190] sm:$0xff]
        %v1452 = vld [vmem:[%s1400 + $0x198] sm:$0xff]
        %v1453 = vld [vmem:[%s1400 + $0x1a0] sm:$0xff]
        %v1454 = vld [vmem:[%s1400 + $0x1a8] sm:$0xff]
        %v1455 = vld [vmem:[%s1400 + $0x1b0] sm:$0xff]
        %v1456 = vld [vmem:[%s1400 + $0x1b8] sm:$0xff]
        %v1457 = vld [vmem:[%s1400 + $0x1c0] sm:$0xff]
        %v1458 = vld [vmem:[%s1400 + $0x1c8] sm:$0xff]
        %v1459 = vld [vmem:[%s1400 + $0x1d0] sm:$0xff]
        %v1460 = vld [vmem:[%s1400 + $0x1d8] sm:$0xff]
        %v1461 = vld [vmem:[%s1400 + $0x1e0] sm:$0xff]
        %v1462 = vld [vmem:[%s1400 + $0x1e8] sm:$0xff]
        %v1463 = vld [vmem:[%s1400 + $0x1f0] sm:$0xff]
        %v1464 = vld [vmem:[%s1400 + $0x1f8] sm:$0xff]
        %s1465 = scalar_lea.vmem [#allocation8], 512
        %v1466 = vld [vmem:[%s1465] sm:$0xff]
        %v1467 = vld [vmem:[%s1465 + $0x8] sm:$0xff]
        %v1468 = vld [vmem:[%s1465 + $0x10] sm:$0xff]
        %v1469 = vld [vmem:[%s1465 + $0x18] sm:$0xff]
        %v1470 = vld [vmem:[%s1465 + $0x20] sm:$0xff]
        %v1471 = vld [vmem:[%s1465 + $0x28] sm:$0xff]
        %v1472 = vld [vmem:[%s1465 + $0x30] sm:$0xff]
        %v1473 = vld [vmem:[%s1465 + $0x38] sm:$0xff]
        %v1474 = vld [vmem:[%s1465 + $0x40] sm:$0xff]
        %v1475 = vld [vmem:[%s1465 + $0x48] sm:$0xff]
        %v1476 = vld [vmem:[%s1465 + $0x50] sm:$0xff]
        %v1477 = vld [vmem:[%s1465 + $0x58] sm:$0xff]
        %v1478 = vld [vmem:[%s1465 + $0x60] sm:$0xff]
        %v1479 = vld [vmem:[%s1465 + $0x68] sm:$0xff]
        %v1480 = vld [vmem:[%s1465 + $0x70] sm:$0xff]
        %v1481 = vld [vmem:[%s1465 + $0x78] sm:$0xff]
        %v1482 = vld [vmem:[%s1465 + $0x80] sm:$0xff]
        %v1483 = vld [vmem:[%s1465 + $0x88] sm:$0xff]
        %v1484 = vld [vmem:[%s1465 + $0x90] sm:$0xff]
        %v1485 = vld [vmem:[%s1465 + $0x98] sm:$0xff]
        %v1486 = vld [vmem:[%s1465 + $0xa0] sm:$0xff]
        %v1487 = vld [vmem:[%s1465 + $0xa8] sm:$0xff]
        %v1488 = vld [vmem:[%s1465 + $0xb0] sm:$0xff]
        %v1489 = vld [vmem:[%s1465 + $0xb8] sm:$0xff]
        %v1490 = vld [vmem:[%s1465 + $0xc0] sm:$0xff]
        %v1491 = vld [vmem:[%s1465 + $0xc8] sm:$0xff]
        %v1492 = vld [vmem:[%s1465 + $0xd0] sm:$0xff]
        %v1493 = vld [vmem:[%s1465 + $0xd8] sm:$0xff]
        %v1494 = vld [vmem:[%s1465 + $0xe0] sm:$0xff]
        %v1495 = vld [vmem:[%s1465 + $0xe8] sm:$0xff]
        %v1496 = vld [vmem:[%s1465 + $0xf0] sm:$0xff]
        %v1497 = vld [vmem:[%s1465 + $0xf8] sm:$0xff]
        %v1498 = vld [vmem:[%s1465 + $0x100] sm:$0xff]
        %v1499 = vld [vmem:[%s1465 + $0x108] sm:$0xff]
        %v1500 = vld [vmem:[%s1465 + $0x110] sm:$0xff]
        %v1501 = vld [vmem:[%s1465 + $0x118] sm:$0xff]
        %v1502 = vld [vmem:[%s1465 + $0x120] sm:$0xff]
        %v1503 = vld [vmem:[%s1465 + $0x128] sm:$0xff]
        %v1504 = vld [vmem:[%s1465 + $0x130] sm:$0xff]
        %v1505 = vld [vmem:[%s1465 + $0x138] sm:$0xff]
        %v1506 = vld [vmem:[%s1465 + $0x140] sm:$0xff]
        %v1507 = vld [vmem:[%s1465 + $0x148] sm:$0xff]
        %v1508 = vld [vmem:[%s1465 + $0x150] sm:$0xff]
        %v1509 = vld [vmem:[%s1465 + $0x158] sm:$0xff]
        %v1510 = vld [vmem:[%s1465 + $0x160] sm:$0xff]
        %v1511 = vld [vmem:[%s1465 + $0x168] sm:$0xff]
        %v1512 = vld [vmem:[%s1465 + $0x170] sm:$0xff]
        %v1513 = vld [vmem:[%s1465 + $0x178] sm:$0xff]
        %v1514 = vld [vmem:[%s1465 + $0x180] sm:$0xff]
        %v1515 = vld [vmem:[%s1465 + $0x188] sm:$0xff]
        %v1516 = vld [vmem:[%s1465 + $0x190] sm:$0xff]
        %v1517 = vld [vmem:[%s1465 + $0x198] sm:$0xff]
        %v1518 = vld [vmem:[%s1465 + $0x1a0] sm:$0xff]
        %v1519 = vld [vmem:[%s1465 + $0x1a8] sm:$0xff]
        %v1520 = vld [vmem:[%s1465 + $0x1b0] sm:$0xff]
        %v1521 = vld [vmem:[%s1465 + $0x1b8] sm:$0xff]
        %v1522 = vld [vmem:[%s1465 + $0x1c0] sm:$0xff]
        %v1523 = vld [vmem:[%s1465 + $0x1c8] sm:$0xff]
        %v1524 = vld [vmem:[%s1465 + $0x1d0] sm:$0xff]
        %v1525 = vld [vmem:[%s1465 + $0x1d8] sm:$0xff]
        %v1526 = vld [vmem:[%s1465 + $0x1e0] sm:$0xff]
        %v1527 = vld [vmem:[%s1465 + $0x1e8] sm:$0xff]
        %v1528 = vld [vmem:[%s1465 + $0x1f0] sm:$0xff]
        %v1529 = vld [vmem:[%s1465 + $0x1f8] sm:$0xff]
        %1530 = vmatprep.subr.mxu0 %v1402
        %1531 = vmatpush1.msra.mxu0 %v1401
        %1532 = vmatprep.subr.mxu0 %v1404
        %1533 = vmatpush1.msra.mxu0 %v1403
        %1534 = vmatprep.subr.mxu0 %v1406
        %1535 = vmatpush1.msra.mxu0 %v1405
        %1536 = vmatprep.subr.mxu0 %v1408
        %1537 = vmatpush1.msra.mxu0 %v1407
        %1538 = vmatprep.subr.mxu0 %v1410
        %1539 = vmatpush1.msra.mxu0 %v1409
        %1540 = vmatprep.subr.mxu0 %v1412
        %1541 = vmatpush1.msra.mxu0 %v1411
        %1542 = vmatprep.subr.mxu0 %v1414
        %1543 = vmatpush1.msra.mxu0 %v1413
        %1544 = vmatprep.subr.mxu0 %v1416
        %1545 = vmatpush1.msra.mxu0 %v1415
        %1546 = vmatprep.subr.mxu0 %v1418
        %1547 = vmatpush1.msra.mxu0 %v1417
        %1548 = vmatprep.subr.mxu0 %v1420
        %1549 = vmatpush1.msra.mxu0 %v1419
        %1550 = vmatprep.subr.mxu0 %v1422
        %1551 = vmatpush1.msra.mxu0 %v1421
        %1552 = vmatprep.subr.mxu0 %v1424
        %1553 = vmatpush1.msra.mxu0 %v1423
        %1554 = vmatprep.subr.mxu0 %v1426
        %1555 = vmatpush1.msra.mxu0 %v1425
        %1556 = vmatprep.subr.mxu0 %v1428
        %1557 = vmatpush1.msra.mxu0 %v1427
        %1558 = vmatprep.subr.mxu0 %v1430
        %1559 = vmatpush1.msra.mxu0 %v1429
        %1560 = vmatprep.subr.mxu0 %v1432
        %1561 = vmatpush1.msra.mxu0 %v1431
        %1562 = vmatprep.subr.mxu0 %v1434
        %1563 = vmatpush1.msra.mxu0 %v1433
        %1564 = vmatprep.subr.mxu0 %v1436
        %1565 = vmatpush1.msra.mxu0 %v1435
        %1566 = vmatprep.subr.mxu0 %v1438
        %1567 = vmatpush1.msra.mxu0 %v1437
        %1568 = vmatprep.subr.mxu0 %v1440
        %1569 = vmatpush1.msra.mxu0 %v1439
        %1570 = vmatprep.subr.mxu0 %v1442
        %1571 = vmatpush1.msra.mxu0 %v1441
        %1572 = vmatprep.subr.mxu0 %v1444
        %1573 = vmatpush1.msra.mxu0 %v1443
        %1574 = vmatprep.subr.mxu0 %v1446
        %1575 = vmatpush1.msra.mxu0 %v1445
        %1576 = vmatprep.subr.mxu0 %v1448
        %1577 = vmatpush1.msra.mxu0 %v1447
        %1578 = vmatprep.subr.mxu0 %v1450
        %1579 = vmatpush1.msra.mxu0 %v1449
        %1580 = vmatprep.subr.mxu0 %v1452
        %1581 = vmatpush1.msra.mxu0 %v1451
        %1582 = vmatprep.subr.mxu0 %v1454
        %1583 = vmatpush1.msra.mxu0 %v1453
        %1584 = vmatprep.subr.mxu0 %v1456
        %1585 = vmatpush1.msra.mxu0 %v1455
        %1586 = vmatprep.subr.mxu0 %v1458
        %1587 = vmatpush1.msra.mxu0 %v1457
        %1588 = vmatprep.subr.mxu0 %v1460
        %1589 = vmatpush1.msra.mxu0 %v1459
        %1590 = vmatprep.subr.mxu0 %v1462
        %1591 = vmatpush1.msra.mxu0 %v1461
        %1592 = vmatprep.subr.mxu0 %v1464
        %1593 = vmatpush1.msra.mxu0 %v1463
        %1594 = vmatprep.mubr.f32.mxu0 %v1397
        %1595 = vmatmul.mubr.f32.gmra.mrb[0].mxu0 %v1396
        %v1596 = vpop.f32.mrb[0].mxu0
        %v1597 = vadd.f32 0.0, %v1596
        %v1598 = vpop.f32.mrb[0].mxu0
        %v1599 = vadd.f32 0.0, %v1598
        %1600 = vmatprep.mubr.f32.mxu0 %v1399
        %1601 = vmatmul.mubr.f32.gmra.mrb[0].mxu0 %v1398
        %v1602 = vpop.f32.mrb[0].mxu0
        %v1603 = vadd.f32 0.0, %v1602
        %v1604 = vpop.f32.mrb[0].mxu0
        %v1605 = vadd.f32 0.0, %v1604
        %1606 = vdwg.mxu0
        %1607 = vmatprep.subr.mxu0 %v346
        %1608 = vmatpush1.msra.mxu0 %v345
        %1609 = vmatprep.subr.mxu0 %v348
        %1610 = vmatpush1.msra.mxu0 %v347
        %1611 = vmatprep.subr.mxu0 %v350
        %1612 = vmatpush1.msra.mxu0 %v349
        %1613 = vmatprep.subr.mxu0 %v352
        %1614 = vmatpush1.msra.mxu0 %v351
        %1615 = vmatprep.subr.mxu0 %v354
        %1616 = vmatpush1.msra.mxu0 %v353
        %1617 = vmatprep.subr.mxu0 %v356
        %1618 = vmatpush1.msra.mxu0 %v355
        %1619 = vmatprep.subr.mxu0 %v358
        %1620 = vmatpush1.msra.mxu0 %v357
        %1621 = vmatprep.subr.mxu0 %v360
        %1622 = vmatpush1.msra.mxu0 %v359
        %1623 = vmatprep.subr.mxu0 %v362
        %1624 = vmatpush1.msra.mxu0 %v361
        %1625 = vmatprep.subr.mxu0 %v364
        %1626 = vmatpush1.msra.mxu0 %v363
        %1627 = vmatprep.subr.mxu0 %v366
        %1628 = vmatpush1.msra.mxu0 %v365
        %1629 = vmatprep.subr.mxu0 %v368
        %1630 = vmatpush1.msra.mxu0 %v367
        %1631 = vmatprep.subr.mxu0 %v370
        %1632 = vmatpush1.msra.mxu0 %v369
        %1633 = vmatprep.subr.mxu0 %v372
        %1634 = vmatpush1.msra.mxu0 %v371
        %1635 = vmatprep.subr.mxu0 %v374
        %1636 = vmatpush1.msra.mxu0 %v373
        %1637 = vmatprep.subr.mxu0 %v376
        %1638 = vmatpush1.msra.mxu0 %v375
        %1639 = vmatprep.subr.mxu0 %v378
        %1640 = vmatpush1.msra.mxu0 %v377
        %1641 = vmatprep.subr.mxu0 %v380
        %1642 = vmatpush1.msra.mxu0 %v379
        %1643 = vmatprep.subr.mxu0 %v382
        %1644 = vmatpush1.msra.mxu0 %v381
        %1645 = vmatprep.subr.mxu0 %v384
        %1646 = vmatpush1.msra.mxu0 %v383
        %1647 = vmatprep.subr.mxu0 %v386
        %1648 = vmatpush1.msra.mxu0 %v385
        %1649 = vmatprep.subr.mxu0 %v388
        %1650 = vmatpush1.msra.mxu0 %v387
        %1651 = vmatprep.subr.mxu0 %v390
        %1652 = vmatpush1.msra.mxu0 %v389
        %1653 = vmatprep.subr.mxu0 %v392
        %1654 = vmatpush1.msra.mxu0 %v391
        %1655 = vmatprep.subr.mxu0 %v394
        %1656 = vmatpush1.msra.mxu0 %v393
        %1657 = vmatprep.subr.mxu0 %v396
        %1658 = vmatpush1.msra.mxu0 %v395
        %1659 = vmatprep.subr.mxu0 %v398
        %1660 = vmatpush1.msra.mxu0 %v397
        %1661 = vmatprep.subr.mxu0 %v400
        %1662 = vmatpush1.msra.mxu0 %v399
        %1663 = vmatprep.subr.mxu0 %v402
        %1664 = vmatpush1.msra.mxu0 %v401
        %1665 = vmatprep.subr.mxu0 %v404
        %1666 = vmatpush1.msra.mxu0 %v403
        %1667 = vmatprep.subr.mxu0 %v406
        %1668 = vmatpush1.msra.mxu0 %v405
        %1669 = vmatprep.subr.mxu0 %v408
        %1670 = vmatpush1.msra.mxu0 %v407
        %1671 = vmatprep.mubr.f32.mxu0 %v1599
        %1672 = vmatmul.mubr.f32.gmra.mrb[0].mxu0 %v1597
        %v1673 = vpop.f32.mrb[0].mxu0
        %v1674 = vadd.f32 0.0, %v1673
        %v1675 = vpop.f32.mrb[0].mxu0
        %v1676 = vadd.f32 0.0, %v1675
        %1677 = vmatprep.mubr.f32.mxu0 %v1605
        %1678 = vmatmul.mubr.f32.gmra.mrb[0].mxu0 %v1603
        %v1679 = vpop.f32.mrb[0].mxu0
        %v1680 = vadd.f32 0.0, %v1679
        %v1681 = vpop.f32.mrb[0].mxu0
        %v1682 = vadd.f32 0.0, %v1681
        %1683 = vdwg.mxu0
        %v1684 = vmul.f32 %v1597, %v1597
        %v1685 = vmul.f32 %v1599, %v1599
        %v1686 = vmul.f32 %v1603, %v1603
        %v1687 = vmul.f32 %v1605, %v1605
        %1688 = vmatprep.subr.mxu0 %v346
        %1689 = vmatpush1.msra.mxu0 %v345
        %1690 = vmatprep.subr.mxu0 %v348
        %1691 = vmatpush1.msra.mxu0 %v347
        %1692 = vmatprep.subr.mxu0 %v350
        %1693 = vmatpush1.msra.mxu0 %v349
        %1694 = vmatprep.subr.mxu0 %v352
        %1695 = vmatpush1.msra.mxu0 %v351
        %1696 = vmatprep.subr.mxu0 %v354
        %1697 = vmatpush1.msra.mxu0 %v353
        %1698 = vmatprep.subr.mxu0 %v356
        %1699 = vmatpush1.msra.mxu0 %v355
        %1700 = vmatprep.subr.mxu0 %v358
        %1701 = vmatpush1.msra.mxu0 %v357
        %1702 = vmatprep.subr.mxu0 %v360
        %1703 = vmatpush1.msra.mxu0 %v359
        %1704 = vmatprep.subr.mxu0 %v362
        %1705 = vmatpush1.msra.mxu0 %v361
        %1706 = vmatprep.subr.mxu0 %v364
        %1707 = vmatpush1.msra.mxu0 %v363
        %1708 = vmatprep.subr.mxu0 %v366
        %1709 = vmatpush1.msra.mxu0 %v365
        %1710 = vmatprep.subr.mxu0 %v368
        %1711 = vmatpush1.msra.mxu0 %v367
        %1712 = vmatprep.subr.mxu0 %v370
        %1713 = vmatpush1.msra.mxu0 %v369
        %1714 = vmatprep.subr.mxu0 %v372
        %1715 = vmatpush1.msra.mxu0 %v371
        %1716 = vmatprep.subr.mxu0 %v374
        %1717 = vmatpush1.msra.mxu0 %v373
        %1718 = vmatprep.subr.mxu0 %v376
        %1719 = vmatpush1.msra.mxu0 %v375
        %1720 = vmatprep.subr.mxu0 %v378
        %1721 = vmatpush1.msra.mxu0 %v377
        %1722 = vmatprep.subr.mxu0 %v380
        %1723 = vmatpush1.msra.mxu0 %v379
        %1724 = vmatprep.subr.mxu0 %v382
        %1725 = vmatpush1.msra.mxu0 %v381
        %1726 = vmatprep.subr.mxu0 %v384
        %1727 = vmatpush1.msra.mxu0 %v383
        %1728 = vmatprep.subr.mxu0 %v386
        %1729 = vmatpush1.msra.mxu0 %v385
        %1730 = vmatprep.subr.mxu0 %v388
        %1731 = vmatpush1.msra.mxu0 %v387
        %1732 = vmatprep.subr.mxu0 %v390
        %1733 = vmatpush1.msra.mxu0 %v389
        %1734 = vmatprep.subr.mxu0 %v392
        %1735 = vmatpush1.msra.mxu0 %v391
        %1736 = vmatprep.subr.mxu0 %v394
        %1737 = vmatpush1.msra.mxu0 %v393
        %1738 = vmatprep.subr.mxu0 %v396
        %1739 = vmatpush1.msra.mxu0 %v395
        %1740 = vmatprep.subr.mxu0 %v398
        %1741 = vmatpush1.msra.mxu0 %v397
        %1742 = vmatprep.subr.mxu0 %v400
        %1743 = vmatpush1.msra.mxu0 %v399
        %1744 = vmatprep.subr.mxu0 %v402
        %1745 = vmatpush1.msra.mxu0 %v401
        %1746 = vmatprep.subr.mxu0 %v404
        %1747 = vmatpush1.msra.mxu0 %v403
        %1748 = vmatprep.subr.mxu0 %v406
        %1749 = vmatpush1.msra.mxu0 %v405
        %1750 = vmatprep.subr.mxu0 %v408
        %1751 = vmatpush1.msra.mxu0 %v407
        %1752 = vmatprep.mubr.f32.mxu0 %v1685
        %1753 = vmatmul.mubr.f32.gmra.mrb[0].mxu0 %v1684
        %v1754 = vpop.f32.mrb[0].mxu0
        %v1755 = vadd.f32 0.0, %v1754
        %v1756 = vpop.f32.mrb[0].mxu0
        %v1757 = vadd.f32 0.0, %v1756
        %1758 = vmatprep.mubr.f32.mxu0 %v1687
        %1759 = vmatmul.mubr.f32.gmra.mrb[0].mxu0 %v1686
        %v1760 = vpop.f32.mrb[0].mxu0
        %v1761 = vadd.f32 0.0, %v1760
        %v1762 = vpop.f32.mrb[0].mxu0
        %v1763 = vadd.f32 0.0, %v1762
        %1764 = vdwg.mxu0
        %v1765 = vmul.f32 %v1674, 0.03125
        %v1766 = vmul.f32 %v1676, 0.03125
        %v1767 = vmul.f32 %v1680, 0.03125
        %v1768 = vmul.f32 %v1682, 0.03125
        %v1769 = vmul.f32 %v1755, 0.03125
        %v1770 = vmul.f32 %v1757, 0.03125
        %v1771 = vmul.f32 %v1761, 0.03125
        %v1772 = vmul.f32 %v1763, 0.03125
        %v1773 = vmul.f32 %v1765, %v1765
        %v1774 = vmul.f32 %v1766, %v1766
        %v1775 = vmul.f32 %v1767, %v1767
        %v1776 = vmul.f32 %v1768, %v1768
        %v1777 = vsub.f32 %v1769, %v1773
        %v1778 = vsub.f32 %v1770, %v1774
        %v1779 = vsub.f32 %v1771, %v1775
        %v1780 = vsub.f32 %v1772, %v1776
        %v1781 = vmax.f32 %v1777, 0.0
        %v1782 = vmax.f32 %v1778, 0.0
        %v1783 = vmax.f32 %v1779, 0.0
        %v1784 = vmax.f32 %v1780, 0.0
        %v1785 = vsub.f32 %v1597, %v1765
        %v1786 = vsub.f32 %v1599, %v1766
        %v1787 = vsub.f32 %v1603, %v1767
        %v1788 = vsub.f32 %v1605, %v1768
        %v1789 = vadd.f32 %v1781, 1e-05
        %v1790 = vadd.f32 %v1782, 1e-05
        %v1791 = vadd.f32 %v1783, 1e-05
        %v1792 = vadd.f32 %v1784, 1e-05
        %v1793 = vrsqrt.pop %v1789
        %v1794 = vrsqrt.pop %v1790
        %v1795 = vrsqrt.pop %v1791
        %v1796 = vrsqrt.pop %v1792
        %v1797 = vmul.f32 %v1785, %v1793
        %v1798 = vmul.f32 %v1786, %v1794
        %v1799 = vmul.f32 %v1787, %v1795
        %v1800 = vmul.f32 %v1788, %v1796
        %v1801 = vtanh.pop %v1797
        %v1802 = vtanh.pop %v1798
        %v1803 = vtanh.pop %v1799
        %v1804 = vtanh.pop %v1800
        %1805 = vmatprep.subr.mxu0 %v1467
        %1806 = vmatpush1.msra.mxu0 %v1466
        %1807 = vmatprep.subr.mxu0 %v1469
        %1808 = vmatpush1.msra.mxu0 %v1468
        %1809 = vmatprep.subr.mxu0 %v1471
        %1810 = vmatpush1.msra.mxu0 %v1470
        %1811 = vmatprep.subr.mxu0 %v1473
        %1812 = vmatpush1.msra.mxu0 %v1472
        %1813 = vmatprep.subr.mxu0 %v1475
        %1814 = vmatpush1.msra.mxu0 %v1474
        %1815 = vmatprep.subr.mxu0 %v1477
        %1816 = vmatpush1.msra.mxu0 %v1476
        %1817 = vmatprep.subr.mxu0 %v1479
        %1818 = vmatpush1.msra.mxu0 %v1478
        %1819 = vmatprep.subr.mxu0 %v1481
        %1820 = vmatpush1.msra.mxu0 %v1480
        %1821 = vmatprep.subr.mxu0 %v1483
        %1822 = vmatpush1.msra.mxu0 %v1482
        %1823 = vmatprep.subr.mxu0 %v1485
        %1824 = vmatpush1.msra.mxu0 %v1484
        %1825 = vmatprep.subr.mxu0 %v1487
        %1826 = vmatpush1.msra.mxu0 %v1486
        %1827 = vmatprep.subr.mxu0 %v1489
        %1828 = vmatpush1.msra.mxu0 %v1488
        %1829 = vmatprep.subr.mxu0 %v1491
        %1830 = vmatpush1.msra.mxu0 %v1490
        %1831 = vmatprep.subr.mxu0 %v1493
        %1832 = vmatpush1.msra.mxu0 %v1492
        %1833 = vmatprep.subr.mxu0 %v1495
        %1834 = vmatpush1.msra.mxu0 %v1494
        %1835 = vmatprep.subr.mxu0 %v1497
        %1836 = vmatpush1.msra.mxu0 %v1496
        %1837 = vmatprep.subr.mxu0 %v1499
        %1838 = vmatpush1.msra.mxu0 %v1498
        %1839 = vmatprep.subr.mxu0 %v1501
        %1840 = vmatpush1.msra.mxu0 %v1500
        %1841 = vmatprep.subr.mxu0 %v1503
        %1842 = vmatpush1.msra.mxu0 %v1502
        %1843 = vmatprep.subr.mxu0 %v1505
        %1844 = vmatpush1.msra.mxu0 %v1504
        %1845 = vmatprep.subr.mxu0 %v1507
        %1846 = vmatpush1.msra.mxu0 %v1506
        %1847 = vmatprep.subr.mxu0 %v1509
        %1848 = vmatpush1.msra.mxu0 %v1508
        %1849 = vmatprep.subr.mxu0 %v1511
        %1850 = vmatpush1.msra.mxu0 %v1510
        %1851 = vmatprep.subr.mxu0 %v1513
        %1852 = vmatpush1.msra.mxu0 %v1512
        %1853 = vmatprep.subr.mxu0 %v1515
        %1854 = vmatpush1.msra.mxu0 %v1514
        %1855 = vmatprep.subr.mxu0 %v1517
        %1856 = vmatpush1.msra.mxu0 %v1516
        %1857 = vmatprep.subr.mxu0 %v1519
        %1858 = vmatpush1.msra.mxu0 %v1518
        %1859 = vmatprep.subr.mxu0 %v1521
        %1860 = vmatpush1.msra.mxu0 %v1520
        %1861 = vmatprep.subr.mxu0 %v1523
        %1862 = vmatpush1.msra.mxu0 %v1522
        %1863 = vmatprep.subr.mxu0 %v1525
        %1864 = vmatpush1.msra.mxu0 %v1524
        %1865 = vmatprep.subr.mxu0 %v1527
        %1866 = vmatpush1.msra.mxu0 %v1526
        %1867 = vmatprep.subr.mxu0 %v1529
        %1868 = vmatpush1.msra.mxu0 %v1528
        %1869 = vmatprep.mubr.f32.mxu0 %v1802
        %1870 = vmatmul.mubr.f32.gmra.mrb[0].mxu0 %v1801
        %v1871 = vpop.f32.mrb[0].mxu0
        %v1872 = vadd.f32 0.0, %v1871
        %v1873 = vpop.f32.mrb[0].mxu0
        %v1874 = vadd.f32 0.0, %v1873
        %1875 = vmatprep.mubr.f32.mxu0 %v1804
        %1876 = vmatmul.mubr.f32.gmra.mrb[0].mxu0 %v1803
        %v1877 = vpop.f32.mrb[0].mxu0
        %v1878 = vadd.f32 0.0, %v1877
        %v1879 = vpop.f32.mrb[0].mxu0
        %v1880 = vadd.f32 0.0, %v1879
        %1881 = vdwg.mxu0
        %1882 = vmatprep.subr.mxu0 %v346
        %1883 = vmatpush1.msra.mxu0 %v345
        %1884 = vmatprep.subr.mxu0 %v348
        %1885 = vmatpush1.msra.mxu0 %v347
        %1886 = vmatprep.subr.mxu0 %v350
        %1887 = vmatpush1.msra.mxu0 %v349
        %1888 = vmatprep.subr.mxu0 %v352
        %1889 = vmatpush1.msra.mxu0 %v351
        %1890 = vmatprep.subr.mxu0 %v354
        %1891 = vmatpush1.msra.mxu0 %v353
        %1892 = vmatprep.subr.mxu0 %v356
        %1893 = vmatpush1.msra.mxu0 %v355
        %1894 = vmatprep.subr.mxu0 %v358
        %1895 = vmatpush1.msra.mxu0 %v357
        %1896 = vmatprep.subr.mxu0 %v360
        %1897 = vmatpush1.msra.mxu0 %v359
        %1898 = vmatprep.subr.mxu0 %v362
        %1899 = vmatpush1.msra.mxu0 %v361
        %1900 = vmatprep.subr.mxu0 %v364
        %1901 = vmatpush1.msra.mxu0 %v363
        %1902 = vmatprep.subr.mxu0 %v366
        %1903 = vmatpush1.msra.mxu0 %v365
        %1904 = vmatprep.subr.mxu0 %v368
        %1905 = vmatpush1.msra.mxu0 %v367
        %1906 = vmatprep.subr.mxu0 %v370
        %1907 = vmatpush1.msra.mxu0 %v369
        %1908 = vmatprep.subr.mxu0 %v372
        %1909 = vmatpush1.msra.mxu0 %v371
        %1910 = vmatprep.subr.mxu0 %v374
        %1911 = vmatpush1.msra.mxu0 %v373
        %1912 = vmatprep.subr.mxu0 %v376
        %1913 = vmatpush1.msra.mxu0 %v375
        %1914 = vmatprep.subr.mxu0 %v378
        %1915 = vmatpush1.msra.mxu0 %v377
        %1916 = vmatprep.subr.mxu0 %v380
        %1917 = vmatpush1.msra.mxu0 %v379
        %1918 = vmatprep.subr.mxu0 %v382
        %1919 = vmatpush1.msra.mxu0 %v381
        %1920 = vmatprep.subr.mxu0 %v384
        %1921 = vmatpush1.msra.mxu0 %v383
        %1922 = vmatprep.subr.mxu0 %v386
        %1923 = vmatpush1.msra.mxu0 %v385
        %1924 = vmatprep.subr.mxu0 %v388
        %1925 = vmatpush1.msra.mxu0 %v387
        %1926 = vmatprep.subr.mxu0 %v390
        %1927 = vmatpush1.msra.mxu0 %v389
        %1928 = vmatprep.subr.mxu0 %v392
        %1929 = vmatpush1.msra.mxu0 %v391
        %1930 = vmatprep.subr.mxu0 %v394
        %1931 = vmatpush1.msra.mxu0 %v393
        %1932 = vmatprep.subr.mxu0 %v396
        %1933 = vmatpush1.msra.mxu0 %v395
        %1934 = vmatprep.subr.mxu0 %v398
        %1935 = vmatpush1.msra.mxu0 %v397
        %1936 = vmatprep.subr.mxu0 %v400
        %1937 = vmatpush1.msra.mxu0 %v399
        %1938 = vmatprep.subr.mxu0 %v402
        %1939 = vmatpush1.msra.mxu0 %v401
        %1940 = vmatprep.subr.mxu0 %v404
        %1941 = vmatpush1.msra.mxu0 %v403
        %1942 = vmatprep.subr.mxu0 %v406
        %1943 = vmatpush1.msra.mxu0 %v405
        %1944 = vmatprep.subr.mxu0 %v408
        %1945 = vmatpush1.msra.mxu0 %v407
        %1946 = vmatprep.mubr.f32.mxu0 %v1874
        %1947 = vmatmul.mubr.f32.gmra.mrb[0].mxu0 %v1872
        %v1948 = vpop.f32.mrb[0].mxu0
        %v1949 = vadd.f32 0.0, %v1948
        %v1950 = vpop.f32.mrb[0].mxu0
        %v1951 = vadd.f32 0.0, %v1950
        %1952 = vmatprep.mubr.f32.mxu0 %v1880
        %1953 = vmatmul.mubr.f32.gmra.mrb[0].mxu0 %v1878
        %v1954 = vpop.f32.mrb[0].mxu0
        %v1955 = vadd.f32 0.0, %v1954
        %v1956 = vpop.f32.mrb[0].mxu0
        %v1957 = vadd.f32 0.0, %v1956
        %1958 = vdwg.mxu0
        %v1959 = vmul.f32 %v1872, %v1872
        %v1960 = vmul.f32 %v1874, %v1874
        %v1961 = vmul.f32 %v1878, %v1878
        %v1962 = vmul.f32 %v1880, %v1880
        %1963 = vmatprep.subr.mxu0 %v346
        %1964 = vmatpush1.msra.mxu0 %v345
        %1965 = vmatprep.subr.mxu0 %v348
        %1966 = vmatpush1.msra.mxu0 %v347
        %1967 = vmatprep.subr.mxu0 %v350
        %1968 = vmatpush1.msra.mxu0 %v349
        %1969 = vmatprep.subr.mxu0 %v352
        %1970 = vmatpush1.msra.mxu0 %v351
        %1971 = vmatprep.subr.mxu0 %v354
        %1972 = vmatpush1.msra.mxu0 %v353
        %1973 = vmatprep.subr.mxu0 %v356
        %1974 = vmatpush1.msra.mxu0 %v355
        %1975 = vmatprep.subr.mxu0 %v358
        %1976 = vmatpush1.msra.mxu0 %v357
        %1977 = vmatprep.subr.mxu0 %v360
        %1978 = vmatpush1.msra.mxu0 %v359
        %1979 = vmatprep.subr.mxu0 %v362
        %1980 = vmatpush1.msra.mxu0 %v361
        %1981 = vmatprep.subr.mxu0 %v364
        %1982 = vmatpush1.msra.mxu0 %v363
        %1983 = vmatprep.subr.mxu0 %v366
        %1984 = vmatpush1.msra.mxu0 %v365
        %1985 = vmatprep.subr.mxu0 %v368
        %1986 = vmatpush1.msra.mxu0 %v367
        %1987 = vmatprep.subr.mxu0 %v370
        %1988 = vmatpush1.msra.mxu0 %v369
        %1989 = vmatprep.subr.mxu0 %v372
        %1990 = vmatpush1.msra.mxu0 %v371
        %1991 = vmatprep.subr.mxu0 %v374
        %1992 = vmatpush1.msra.mxu0 %v373
        %1993 = vmatprep.subr.mxu0 %v376
        %1994 = vmatpush1.msra.mxu0 %v375
        %1995 = vmatprep.subr.mxu0 %v378
        %1996 = vmatpush1.msra.mxu0 %v377
        %1997 = vmatprep.subr.mxu0 %v380
        %1998 = vmatpush1.msra.mxu0 %v379
        %1999 = vmatprep.subr.mxu0 %v382
        %2000 = vmatpush1.msra.mxu0 %v381
        %2001 = vmatprep.subr.mxu0 %v384
        %2002 = vmatpush1.msra.mxu0 %v383
        %2003 = vmatprep.subr.mxu0 %v386
        %2004 = vmatpush1.msra.mxu0 %v385
        %2005 = vmatprep.subr.mxu0 %v388
        %2006 = vmatpush1.msra.mxu0 %v387
        %2007 = vmatprep.subr.mxu0 %v390
        %2008 = vmatpush1.msra.mxu0 %v389
        %2009 = vmatprep.subr.mxu0 %v392
        %2010 = vmatpush1.msra.mxu0 %v391
        %2011 = vmatprep.subr.mxu0 %v394
        %2012 = vmatpush1.msra.mxu0 %v393
        %2013 = vmatprep.subr.mxu0 %v396
        %2014 = vmatpush1.msra.mxu0 %v395
        %2015 = vmatprep.subr.mxu0 %v398
        %2016 = vmatpush1.msra.mxu0 %v397
        %2017 = vmatprep.subr.mxu0 %v400
        %2018 = vmatpush1.msra.mxu0 %v399
        %2019 = vmatprep.subr.mxu0 %v402
        %2020 = vmatpush1.msra.mxu0 %v401
        %2021 = vmatprep.subr.mxu0 %v404
        %2022 = vmatpush1.msra.mxu0 %v403
        %2023 = vmatprep.subr.mxu0 %v406
        %2024 = vmatpush1.msra.mxu0 %v405
        %2025 = vmatprep.subr.mxu0 %v408
        %2026 = vmatpush1.msra.mxu0 %v407
        %2027 = vmatprep.mubr.f32.mxu0 %v1960
        %2028 = vmatmul.mubr.f32.gmra.mrb[0].mxu0 %v1959
        %v2029 = vpop.f32.mrb[0].mxu0
        %v2030 = vadd.f32 0.0, %v2029
        %v2031 = vpop.f32.mrb[0].mxu0
        %v2032 = vadd.f32 0.0, %v2031
        %2033 = vmatprep.mubr.f32.mxu0 %v1962
        %2034 = vmatmul.mubr.f32.gmra.mrb[0].mxu0 %v1961
        %v2035 = vpop.f32.mrb[0].mxu0
        %v2036 = vadd.f32 0.0, %v2035
        %v2037 = vpop.f32.mrb[0].mxu0
        %v2038 = vadd.f32 0.0, %v2037
        %2039 = vdwg.mxu0
        %v2040 = vmul.f32 %v1949, 0.03125
        %v2041 = vmul.f32 %v1951, 0.03125
        %v2042 = vmul.f32 %v1955, 0.03125
        %v2043 = vmul.f32 %v1957, 0.03125
        %v2044 = vmul.f32 %v2030, 0.03125
        %v2045 = vmul.f32 %v2032, 0.03125
        %v2046 = vmul.f32 %v2036, 0.03125
        %v2047 = vmul.f32 %v2038, 0.03125
        %v2048 = vmul.f32 %v2040, %v2040
        %v2049 = vmul.f32 %v2041, %v2041
        %v2050 = vmul.f32 %v2042, %v2042
        %v2051 = vmul.f32 %v2043, %v2043
        %v2052 = vsub.f32 %v2044, %v2048
        %v2053 = vsub.f32 %v2045, %v2049
        %v2054 = vsub.f32 %v2046, %v2050
        %v2055 = vsub.f32 %v2047, %v2051
        %v2056 = vmax.f32 %v2052, 0.0
        %v2057 = vmax.f32 %v2053, 0.0
        %v2058 = vmax.f32 %v2054, 0.0
        %v2059 = vmax.f32 %v2055, 0.0
        %v2060 = vsub.f32 %v1872, %v2040
        %v2061 = vsub.f32 %v1874, %v2041
        %v2062 = vsub.f32 %v1878, %v2042
        %v2063 = vsub.f32 %v1880, %v2043
        %v2064 = vadd.f32 %v2056, 1e-05
        %v2065 = vadd.f32 %v2057, 1e-05
        %v2066 = vadd.f32 %v2058, 1e-05
        %v2067 = vadd.f32 %v2059, 1e-05
        %v2068 = vrsqrt.pop %v2064
        %v2069 = vrsqrt.pop %v2065
        %v2070 = vrsqrt.pop %v2066
        %v2071 = vrsqrt.pop %v2067
        %v2072 = vmul.f32 %v2060, %v2068
        %v2073 = vmul.f32 %v2061, %v2069
        %v2074 = vmul.f32 %v2062, %v2070
        %v2075 = vmul.f32 %v2063, %v2071
        %v2076 = vtanh.pop %v2072
        %v2077 = vtanh.pop %v2073
        %v2078 = vtanh.pop %v2074
        %v2079 = vtanh.pop %v2075
        %v2080 = vadd.f32 %v2076, %v1396
        %v2081 = vadd.f32 %v2077, %v1397
        %v2082 = vadd.f32 %v2078, %v1398
        %v2083 = vadd.f32 %v2079, %v1399
        %v2084 = vld [vmem:[#allocation10] sm:$0xff]
        %v2085 = vld [vmem:[#allocation10 + $0x8] sm:$0xff]
        %v2086 = vld [vmem:[#allocation10 + $0x10] sm:$0xff]
        %v2087 = vld [vmem:[#allocation10 + $0x18] sm:$0xff]
        %v2088 = vld [vmem:[#allocation10 + $0x20] sm:$0xff]
        %v2089 = vld [vmem:[#allocation10 + $0x28] sm:$0xff]
        %v2090 = vld [vmem:[#allocation10 + $0x30] sm:$0xff]
        %v2091 = vld [vmem:[#allocation10 + $0x38] sm:$0xff]
        %v2092 = vld [vmem:[#allocation10 + $0x40] sm:$0xff]
        %v2093 = vld [vmem:[#allocation10 + $0x48] sm:$0xff]
        %v2094 = vld [vmem:[#allocation10 + $0x50] sm:$0xff]
        %v2095 = vld [vmem:[#allocation10 + $0x58] sm:$0xff]
        %v2096 = vld [vmem:[#allocation10 + $0x60] sm:$0xff]
        %v2097 = vld [vmem:[#allocation10 + $0x68] sm:$0xff]
        %v2098 = vld [vmem:[#allocation10 + $0x70] sm:$0xff]
        %v2099 = vld [vmem:[#allocation10 + $0x78] sm:$0xff]
        %v2100 = vld [vmem:[#allocation10 + $0x80] sm:$0xff]
        %v2101 = vld [vmem:[#allocation10 + $0x88] sm:$0xff]
        %v2102 = vld [vmem:[#allocation10 + $0x90] sm:$0xff]
        %v2103 = vld [vmem:[#allocation10 + $0x98] sm:$0xff]
        %v2104 = vld [vmem:[#allocation10 + $0xa0] sm:$0xff]
        %v2105 = vld [vmem:[#allocation10 + $0xa8] sm:$0xff]
        %v2106 = vld [vmem:[#allocation10 + $0xb0] sm:$0xff]
        %v2107 = vld [vmem:[#allocation10 + $0xb8] sm:$0xff]
        %v2108 = vld [vmem:[#allocation10 + $0xc0] sm:$0xff]
        %v2109 = vld [vmem:[#allocation10 + $0xc8] sm:$0xff]
        %v2110 = vld [vmem:[#allocation10 + $0xd0] sm:$0xff]
        %v2111 = vld [vmem:[#allocation10 + $0xd8] sm:$0xff]
        %v2112 = vld [vmem:[#allocation10 + $0xe0] sm:$0xff]
        %v2113 = vld [vmem:[#allocation10 + $0xe8] sm:$0xff]
        %v2114 = vld [vmem:[#allocation10 + $0xf0] sm:$0xff]
        %v2115 = vld [vmem:[#allocation10 + $0xf8] sm:$0xff]
        %2116 = vmatprep.subr.mxu0 0.0
        %2117 = vmatpush1.msra.mxu0 %v2084
        %2118 = vmatprep.subr.mxu0 0.0
        %2119 = vmatpush1.msra.mxu0 %v2085
        %2120 = vmatprep.subr.mxu0 0.0
        %2121 = vmatpush1.msra.mxu0 %v2086
        %2122 = vmatprep.subr.mxu0 0.0
        %2123 = vmatpush1.msra.mxu0 %v2087
        %2124 = vmatprep.subr.mxu0 0.0
        %2125 = vmatpush1.msra.mxu0 %v2088
        %2126 = vmatprep.subr.mxu0 0.0
        %2127 = vmatpush1.msra.mxu0 %v2089
        %2128 = vmatprep.subr.mxu0 0.0
        %2129 = vmatpush1.msra.mxu0 %v2090
        %2130 = vmatprep.subr.mxu0 0.0
        %2131 = vmatpush1.msra.mxu0 %v2091
        %2132 = vmatprep.subr.mxu0 0.0
        %2133 = vmatpush1.msra.mxu0 %v2092
        %2134 = vmatprep.subr.mxu0 0.0
        %2135 = vmatpush1.msra.mxu0 %v2093
        %2136 = vmatprep.subr.mxu0 0.0
        %2137 = vmatpush1.msra.mxu0 %v2094
        %2138 = vmatprep.subr.mxu0 0.0
        %2139 = vmatpush1.msra.mxu0 %v2095
        %2140 = vmatprep.subr.mxu0 0.0
        %2141 = vmatpush1.msra.mxu0 %v2096
        %2142 = vmatprep.subr.mxu0 0.0
        %2143 = vmatpush1.msra.mxu0 %v2097
        %2144 = vmatprep.subr.mxu0 0.0
        %2145 = vmatpush1.msra.mxu0 %v2098
        %2146 = vmatprep.subr.mxu0 0.0
        %2147 = vmatpush1.msra.mxu0 %v2099
        %2148 = vmatprep.subr.mxu0 0.0
        %2149 = vmatpush1.msra.mxu0 %v2100
        %2150 = vmatprep.subr.mxu0 0.0
        %2151 = vmatpush1.msra.mxu0 %v2101
        %2152 = vmatprep.subr.mxu0 0.0
        %2153 = vmatpush1.msra.mxu0 %v2102
        %2154 = vmatprep.subr.mxu0 0.0
        %2155 = vmatpush1.msra.mxu0 %v2103
        %2156 = vmatprep.subr.mxu0 0.0
        %2157 = vmatpush1.msra.mxu0 %v2104
        %2158 = vmatprep.subr.mxu0 0.0
        %2159 = vmatpush1.msra.mxu0 %v2105
        %2160 = vmatprep.subr.mxu0 0.0
        %2161 = vmatpush1.msra.mxu0 %v2106
        %2162 = vmatprep.subr.mxu0 0.0
        %2163 = vmatpush1.msra.mxu0 %v2107
        %2164 = vmatprep.subr.mxu0 0.0
        %2165 = vmatpush1.msra.mxu0 %v2108
        %2166 = vmatprep.subr.mxu0 0.0
        %2167 = vmatpush1.msra.mxu0 %v2109
        %2168 = vmatprep.subr.mxu0 0.0
        %2169 = vmatpush1.msra.mxu0 %v2110
        %2170 = vmatprep.subr.mxu0 0.0
        %2171 = vmatpush1.msra.mxu0 %v2111
        %2172 = vmatprep.subr.mxu0 0.0
        %2173 = vmatpush1.msra.mxu0 %v2112
        %2174 = vmatprep.subr.mxu0 0.0
        %2175 = vmatpush1.msra.mxu0 %v2113
        %2176 = vmatprep.subr.mxu0 0.0
        %2177 = vmatpush1.msra.mxu0 %v2114
        %2178 = vmatprep.subr.mxu0 0.0
        %2179 = vmatpush1.msra.mxu0 %v2115
        %2180 = vmatprep.mubr.f32.mxu0 %v2081
        %2181 = vmatmul.mubr.f32.gmra.mrb[0].mxu0 %v2080
        %v2182 = vpop.f32.mrb[0].mxu0
        %v2183 = vadd.f32 0.0, %v2182
        %v2184 = vpop.f32.mrb[0].mxu0
        %2185 = vmatprep.mubr.f32.mxu0 %v2083
        %2186 = vmatmul.mubr.f32.gmra.mrb[0].mxu0 %v2082
        %v2187 = vpop.f32.mrb[0].mxu0
        %v2188 = vadd.f32 0.0, %v2187
        %v2189 = vpop.f32.mrb[0].mxu0
        %2190 = vdwg.mxu0
        %2191 = vst [vmem:[%s342] sm:$0xff] %v2183
        %2192 = vst [vmem:[%s342 + $0x8] sm:$0xff] %v2188
        %s2193 = sand.u32 %s165, 1
        %s2194 = scalar_lea.sflag [#allocation4], %s2193
        %s2195 = sand.u32 %s165, 1
        %s2196 = smul.addr %s2195, 16
        %s2197 = scalar_lea.vmem [#allocation13], %s2196
        // Predicated region
        $region69: #{tpu_custom_call.1} parent=43 // pred_check
          %p2198 = pneg %p175
        $region70: #{tpu_custom_call.1} parent=43 // pred_check_branch
          %2200 = sbr.rel (%p2198) target = $region72
        $region71: #{tpu_custom_call.1} parent=43 // pred_region
          %s2201 = smul.u32 2, %s26
          %s2203 = ssub.s32 256, 256
          %2204 = vsyncadd %s2194, %s2203
          %s2205 = smul.addr %s2201, 128
          %s2206 = scalar_lea.hbm %s6, %s2205
          %s2207 = sshll.u32 %s2197, 4
          %s2208 = int_to_ptr.vmem [resolvable:$true] %s2207
          %2213 = dma.vmem_to_hbm [thread:$0]  %s2208, 256, %s2206, %s2194, 128, 128, 8
        $region72: #{tpu_custom_call.1} parent=43 // pred_fallthru
          _
      $region44: #{tpu_custom_call.1} parent=5 // pred_fallthru
        _
      %p2214 = scmp.le.s32.totalorder 2, %s21
      // Predicated region
      $region73: #{tpu_custom_call.1} parent=5 // pred_check
        %p2215 = pneg %p2214
      $region74: #{tpu_custom_call.1} parent=5 // pred_check_branch
        %2217 = sbr.rel (%p2215) target = $region76
      $region75: #{tpu_custom_call.1} parent=5 // pred_region
        %s2218 = ssub.s32 %s21, 2
        // Predicated region
        $region77: #{tpu_custom_call.1} parent=75 // pred_check
          %p2219 = pneg %p181
        $region78: #{tpu_custom_call.1} parent=75 // pred_check_branch
          %2221 = sbr.rel (%p2219) target = $region80
        $region79: #{tpu_custom_call.1} parent=75 // pred_region
          %s2222 = sand.u32 %s166, 1
          %s2223 = scalar_lea.sflag [#allocation4], %s2222
          %s2224 = sand.u32 %s166, 1
          %s2225 = smul.addr %s2224, 16
          %s2226 = scalar_lea.vmem [#allocation13], %s2225
          %2227 = dma.done %s2223, 256
        $region80: #{tpu_custom_call.1} parent=75 // pred_fallthru
          _
      $region76: #{tpu_custom_call.1} parent=5 // pred_fallthru
        _
    $region6: #{tpu_custom_call.1} parent=1 // loop_footer
      %s25 = sadd.s32 1, %s21
    $region7: #{tpu_custom_call.1} parent=1 // loop_footer_branch
      %20 = sbr.rel target = $region3
    $region8: #{tpu_custom_call.1} parent=1 // loop_exit
      _
    %2228 = vsyncpa [#allocation3], 1
    %s2229 = scalar_lea.sflag [#allocation3], 1
    %2230 = vsyncpa %s2229, 1
    %2231 = vsyncpa [#allocation6], 1
    %2232 = vsyncpa [#allocation9], 1
    %2233 = vsyncpa [#allocation12], 1
    %2234 = vsyncpa [#allocation4], 1
    %s2235 = scalar_lea.sflag [#allocation4], 1
    %2236 = vsyncpa %s2235, 1

</llo_original>
